<compile_context>
chip_gen: v7x
topology: tpu7x:2x2x1
jax: 0.10.0
libtpu: 0.0.40
codegen_flags: <defaults>
</compile_context>

<pallas_src>
import functools
import math

import jax
import jax.numpy as jnp
from jax.experimental import pallas as pl
from jax.experimental.pallas import tpu as pltpu

H = 128            # hidden_size (small TPU-friendly stand-in for 384)
NUM_HEADS = 4
HEAD_DIM = H // NUM_HEADS
EXP = 4            # FFN expansion rate
FFN_DIM = H * EXP
OUT_DIM = 2
PAD_OUT = 128      # lane-dense padded output width
LN_EPS = 1e-5


def _layernorm(x, gamma, beta):
    # single-pass statistics: one sum + one sum-of-squares cross-lane reduce
    s = jnp.sum(x, axis=-1, keepdims=True)
    ss = jnp.sum(x * x, axis=-1, keepdims=True)
    mean = s * (1.0 / H)
    var = jnp.maximum(ss * (1.0 / H) - mean * mean, 0.0)
    return (x - mean) * jax.lax.rsqrt(var + LN_EPS) * gamma + beta


def atten_model_kernel(
    x_ref,                        # (R, H) flattened activations, R = n_batch*seq_len
    we_ref, be_ref,               # embed (bf16 weight, f32 bias)
    wqkv_ref, bqkv_ref,           # MHA in_proj (H, 3H), Q columns pre-scaled
    wo_ref, bo_ref,               # MHA out_proj (H, H)
    ln2_g_ref, ln2_b_ref,         # add_norm2 LayerNorm
    w1_ref, b1_ref,               # FFN linear 1 (H, 4H)
    w2_ref, b2_ref,               # FFN linear 2 (4H, H)
    ln3_g_ref, ln3_b_ref,         # add_norm3 LayerNorm
    wf_ref, bf_ref,               # final linear, zero-padded to (H, 128)/(1, 128)
    out_ref,                      # (R, 128) lane-dense output
    *, seq_len, n_batch,
):
    f32 = jnp.float32
    bf16 = jnp.bfloat16

    def dense(act, w_ref, b_ref):
        # bf16 operands on the MXU, f32 accumulation, f32 bias add
        return jnp.dot(act.astype(bf16), w_ref[...],
                       preferred_element_type=f32) + b_ref[...]

    x = x_ref[...]                                                   # (R, H) f32

    # ---- embed: x @ We + be ----
    x = dense(x, we_ref, be_ref)

    # ---- add_norm2: x + MHA(LayerNorm(x)) (dropout = identity) ----
    xn = _layernorm(x, ln2_g_ref[...], ln2_b_ref[...])
    qkv = dense(xn, wqkv_ref, bqkv_ref)
    q = qkv[:, 0 * H:1 * H]          # softmax scale already folded into wqkv/bqkv
    k = qkv[:, 1 * H:2 * H]
    v = qkv[:, 2 * H:3 * H]

    # Batched attention over g = (batch, head): one batched score matmul, one
    # softmax over all heads/batches, one batched PV matmul.  The gather into
    # (G, S, DH) uses only static slices + row-concat + a leading-dim split
    # reshape (no transposes).
    G = n_batch * NUM_HEADS

    def to_heads(t):
        parts = []
        for b in range(n_batch):
            rows = slice(b * seq_len, (b + 1) * seq_len)
            for h in range(NUM_HEADS):
                parts.append(t[rows, h * HEAD_DIM:(h + 1) * HEAD_DIM])  # (S, DH)
        return jnp.concatenate(parts, axis=0).reshape(G, seq_len, HEAD_DIM)

    qg = to_heads(q).astype(bf16)                                    # (G, S, DH)
    kg = to_heads(k).astype(bf16)
    vg = to_heads(v).astype(bf16)

    s = jnp.einsum('gqd,gkd->gqk', qg, kg,
                   preferred_element_type=f32)                       # (G, S, S)
    s = s - jnp.max(s, axis=-1, keepdims=True)
    p = jnp.exp(s)
    p = p * pl.reciprocal(jnp.sum(p, axis=-1, keepdims=True), approx=True)
    ctx = jnp.einsum('gqk,gkd->gqd', p.astype(bf16), vg,
                     preferred_element_type=f32)                     # (G, S, DH)

    # Reassemble context in registers (concat heads along lanes per batch,
    # concat batches along rows) and feed straight into the out-projection.
    ctx_full = jnp.concatenate(
        [jnp.concatenate([ctx[b * NUM_HEADS + h] for h in range(NUM_HEADS)],
                         axis=-1)
         for b in range(n_batch)],
        axis=0)                                                      # (R, H)

    attn = dense(ctx_full, wo_ref, bo_ref)
    a = x + attn

    # ---- add_norm3: a + FFN(LayerNorm(a)) (dropout = identity) ----
    an = _layernorm(a, ln3_g_ref[...], ln3_b_ref[...])
    hdn = jnp.maximum(dense(an, w1_ref, b1_ref), 0.0)                # ReLU
    ffn = dense(hdn, w2_ref, b2_ref)
    o = a + ffn

    # ---- final linear, lane-dense (padded to 128 output lanes) ----
    out_ref[...] = dense(o, wf_ref, bf_ref)


def prepare_params(params):
    """One-time host-side transform of model params into kernel layout."""
    (we, be, wqkv, bqkv, wo, bo, ln2_g, ln2_b,
     w1, b1, w2, b2, ln3_g, ln3_b, wf, bf) = params
    bf16 = jnp.bfloat16
    scale = 1.0 / math.sqrt(HEAD_DIM)
    # fold softmax scale into the Q columns of the in-projection
    wqkv_s = wqkv.at[:, :H].multiply(scale)
    bqkv_s = bqkv.at[:, :H].multiply(scale)
    # zero-pad the head to 128 lanes for unmasked stores / full-lane matmul
    wf_pad = jnp.zeros((H, PAD_OUT), jnp.float32).at[:, :OUT_DIM].set(wf)
    bf_pad = jnp.zeros((1, PAD_OUT), jnp.float32).at[:, :OUT_DIM].set(bf)
    # weights in bf16 (halves exposed weight DMA + resident VMEM);
    # biases / LayerNorm params stay f32.
    return (we.astype(bf16), be, wqkv_s.astype(bf16), bqkv_s,
            wo.astype(bf16), bo, ln2_g, ln2_b,
            w1.astype(bf16), b1, w2.astype(bf16), b2,
            ln3_g, ln3_b, wf_pad.astype(bf16), bf_pad)


def atten_model_forward(x, kparams, num_blocks=1):
    """num_blocks=1 (default): single grid step — right choice at toy sizes on
    all generations (splitting duplicates the weight DMA per core and starves
    the MXU).  Raise to 2 on v7x only once rows-per-core reaches ~256."""
    B, S, _ = x.shape
    assert B % num_blocks == 0
    rows_per_block = (B // num_blocks) * S
    R = B * S
    G = B * NUM_HEADS

    x_flat = x.reshape(R, H)
    full = lambda shape: pl.BlockSpec(shape, lambda g: (0,) * len(shape))
    in_specs = [pl.BlockSpec((rows_per_block, H), lambda g: (g, 0))] + [
        full(p.shape) for p in kparams
    ]

    weight_bytes = sum(int(p.size) * p.dtype.itemsize for p in kparams)
    flops = (2 * R * H * (H + 3 * H + H + 4 * H + PAD_OUT)
             + 2 * R * 4 * H * H
             + 2 * 2 * G * S * S * HEAD_DIM)
    cost = pl.CostEstimate(
        flops=int(flops),
        transcendentals=int(G * S * S + 2 * R),
        bytes_accessed=int(weight_bytes + R * H * 4 + R * PAD_OUT * 4))

    out = pl.pallas_call(
        functools.partial(atten_model_kernel,
                          seq_len=S, n_batch=B // num_blocks),
        out_shape=jax.ShapeDtypeStruct((R, PAD_OUT), jnp.float32),
        grid_spec=pltpu.PrefetchScalarGridSpec(
            num_scalar_prefetch=0,
            grid=(num_blocks,),
            in_specs=in_specs,
            out_specs=pl.BlockSpec((rows_per_block, PAD_OUT), lambda g: (g, 0)),
        ),
        compiler_params=pltpu.CompilerParams(
            dimension_semantics=("parallel",)),
        cost_estimate=cost,
    )(x_flat, *kparams)
    return out[:, :OUT_DIM].reshape(B, S, OUT_DIM)


def reference_forward(x, params):
    (we, be, wqkv, bqkv, wo, bo, ln2_g, ln2_b,
     w1, b1, w2, b2, ln3_g, ln3_b, wf, bf) = params

    def ln(t, g, b):
        m = jnp.mean(t, axis=-1, keepdims=True)
        v = jnp.mean((t - m) ** 2, axis=-1, keepdims=True)
        return (t - m) / jnp.sqrt(v + LN_EPS) * g + b

    x = x @ we + be
    xn = ln(x, ln2_g, ln2_b)
    qkv = xn @ wqkv + bqkv
    q, k, v = qkv[..., :H], qkv[..., H:2 * H], qkv[..., 2 * H:]
    B, S, _ = x.shape
    qh = q.reshape(B, S, NUM_HEADS, HEAD_DIM).transpose(0, 2, 1, 3)
    kh = k.reshape(B, S, NUM_HEADS, HEAD_DIM).transpose(0, 2, 1, 3)
    vh = v.reshape(B, S, NUM_HEADS, HEAD_DIM).transpose(0, 2, 1, 3)
    s = jnp.einsum("bhqd,bhkd->bhqk", qh, kh) / math.sqrt(HEAD_DIM)
    p = jax.nn.softmax(s, axis=-1)
    oh = jnp.einsum("bhqk,bhkd->bhqd", p, vh)
    attn = oh.transpose(0, 2, 1, 3).reshape(B, S, H) @ wo + bo
    a = x + attn
    an = ln(a, ln3_g, ln3_b)
    ffn = jnp.maximum(an @ w1 + b1, 0.0) @ w2 + b2
    o = a + ffn
    return o @ wf + bf


def make_params(key):
    ks = jax.random.split(key, 16)
    n = lambda k, shape, s=0.02: (s * jax.random.normal(k, shape)).astype(jnp.float32)
    # weights stored pre-transposed as (in, out); biases as (1, out)
    we = n(ks[0], (H, H));            be = n(ks[1], (1, H))
    wqkv = n(ks[2], (H, 3 * H));      bqkv = n(ks[3], (1, 3 * H))
    wo = n(ks[4], (H, H));            bo = n(ks[5], (1, H))
    ln2_g = jnp.ones((1, H), jnp.float32); ln2_b = jnp.zeros((1, H), jnp.float32)
    w1 = n(ks[6], (H, FFN_DIM));      b1 = n(ks[7], (1, FFN_DIM))
    w2 = n(ks[8], (FFN_DIM, H));      b2 = n(ks[9], (1, H))
    ln3_g = jnp.ones((1, H), jnp.float32); ln3_b = jnp.zeros((1, H), jnp.float32)
    wf = n(ks[10], (H, OUT_DIM));     bf = n(ks[11], (1, OUT_DIM))
    return (we, be, wqkv, bqkv, wo, bo, ln2_g, ln2_b,
            w1, b1, w2, b2, ln3_g, ln3_b, wf, bf)


if __name__ == "__main__":
    key = jax.random.PRNGKey(0)
    kx, kp = jax.random.split(key)
    B, S = 2, 8
    x = jax.random.normal(kx, (B, S, H), dtype=jnp.float32)
    params = make_params(kp)
    kparams = prepare_params(params)      # one-time host-side weight transform

    out = atten_model_forward(x, kparams)  # num_blocks stays 1 at this size
    out = jax.block_until_ready(out)
    assert out.shape == (B, S, OUT_DIM)

    ref = reference_forward(x, params)
    assert jnp.allclose(out, ref, rtol=2e-2, atol=2e-2), (
        float(jnp.max(jnp.abs(out - ref))))

    print("KERNEL_OK")
</pallas_src>

<mosaic_0001>
module attributes {stable_mosaic.version = 11 : i64} {
  func.func @atten_model_kernel(%arg0: i32, %arg1: memref<16x128xf32, #tpu.memory_space<vmem>>, %arg2: memref<128x128xbf16, #tpu.memory_space<vmem>>, %arg3: memref<1x128xf32, #tpu.memory_space<vmem>>, %arg4: memref<128x384xbf16, #tpu.memory_space<vmem>>, %arg5: memref<1x384xf32, #tpu.memory_space<vmem>>, %arg6: memref<128x128xbf16, #tpu.memory_space<vmem>>, %arg7: memref<1x128xf32, #tpu.memory_space<vmem>>, %arg8: memref<1x128xf32, #tpu.memory_space<vmem>>, %arg9: memref<1x128xf32, #tpu.memory_space<vmem>>, %arg10: memref<128x512xbf16, #tpu.memory_space<vmem>>, %arg11: memref<1x512xf32, #tpu.memory_space<vmem>>, %arg12: memref<512x128xbf16, #tpu.memory_space<vmem>>, %arg13: memref<1x128xf32, #tpu.memory_space<vmem>>, %arg14: memref<1x128xf32, #tpu.memory_space<vmem>>, %arg15: memref<1x128xf32, #tpu.memory_space<vmem>>, %arg16: memref<128x128xbf16, #tpu.memory_space<vmem>>, %arg17: memref<1x128xf32, #tpu.memory_space<vmem>>, %arg18: memref<16x128xf32, #tpu.memory_space<vmem>>) attributes {dimension_semantics = [#tpu.dimension_semantics<parallel>], iteration_bounds = array<i64: 1>, scalar_prefetch = 0 : i64, scratch_operands = 0 : i64, tpu.core_type = #tpu.core_type<tc>, window_params = [{transform_indices = @transform_0, window_bounds = array<i64: 16, 128>}, {pipeline_mode = #tpu.pipeline_mode<synchronous>, transform_indices = @transform_1, window_bounds = array<i64: 128, 128>}, {pipeline_mode = #tpu.pipeline_mode<synchronous>, transform_indices = @transform_2, window_bounds = array<i64: 1, 128>}, {pipeline_mode = #tpu.pipeline_mode<synchronous>, transform_indices = @transform_3, window_bounds = array<i64: 128, 384>}, {pipeline_mode = #tpu.pipeline_mode<synchronous>, transform_indices = @transform_4, window_bounds = array<i64: 1, 384>}, {pipeline_mode = #tpu.pipeline_mode<synchronous>, transform_indices = @transform_5, window_bounds = array<i64: 128, 128>}, {pipeline_mode = #tpu.pipeline_mode<synchronous>, transform_indices = @transform_6, window_bounds = array<i64: 1, 128>}, {pipeline_mode = #tpu.pipeline_mode<synchronous>, transform_indices = @transform_7, window_bounds = array<i64: 1, 128>}, {pipeline_mode = #tpu.pipeline_mode<synchronous>, transform_indices = @transform_8, window_bounds = array<i64: 1, 128>}, {pipeline_mode = #tpu.pipeline_mode<synchronous>, transform_indices = @transform_9, window_bounds = array<i64: 128, 512>}, {pipeline_mode = #tpu.pipeline_mode<synchronous>, transform_indices = @transform_10, window_bounds = array<i64: 1, 512>}, {pipeline_mode = #tpu.pipeline_mode<synchronous>, transform_indices = @transform_11, window_bounds = array<i64: 512, 128>}, {pipeline_mode = #tpu.pipeline_mode<synchronous>, transform_indices = @transform_12, window_bounds = array<i64: 1, 128>}, {pipeline_mode = #tpu.pipeline_mode<synchronous>, transform_indices = @transform_13, window_bounds = array<i64: 1, 128>}, {pipeline_mode = #tpu.pipeline_mode<synchronous>, transform_indices = @transform_14, window_bounds = array<i64: 1, 128>}, {pipeline_mode = #tpu.pipeline_mode<synchronous>, transform_indices = @transform_15, window_bounds = array<i64: 128, 128>}, {pipeline_mode = #tpu.pipeline_mode<synchronous>, transform_indices = @transform_16, window_bounds = array<i64: 1, 128>}, {transform_indices = @transform_17, window_bounds = array<i64: 16, 128>}]} {
    %c0 = arith.constant 0 : index
    %c0_0 = arith.constant 0 : index
    %0 = vector.load %arg1[%c0, %c0_0] : memref<16x128xf32, #tpu.memory_space<vmem>>, vector<16x128xf32>
    %1 = arith.truncf %0 : vector<16x128xf32> to vector<16x128xbf16>
    %c0_1 = arith.constant 0 : index
    %c0_2 = arith.constant 0 : index
    %2 = vector.load %arg2[%c0_1, %c0_2] : memref<128x128xbf16, #tpu.memory_space<vmem>>, vector<128x128xbf16>
    %cst = arith.constant dense<0.000000e+00> : vector<16x128xf32>
    %3 = tpu.matmul %1, %2, %cst {dimension_numbers = #tpu.dot_dimension_numbers<[1], [0], [0], [1], [0, 0, 1, 1], [], []>} : vector<16x128xbf16>, vector<128x128xbf16>, vector<16x128xf32> -> vector<16x128xf32>
    %c0_3 = arith.constant 0 : index
    %c0_4 = arith.constant 0 : index
    %4 = vector.load %arg3[%c0_3, %c0_4] : memref<1x128xf32, #tpu.memory_space<vmem>>, vector<1x128xf32>
    %5 = vector.broadcast %4 : vector<1x128xf32> to vector<16x128xf32>
    %6 = arith.addf %3, %5 : vector<16x128xf32>
    %c0_5 = arith.constant 0 : index
    %c0_6 = arith.constant 0 : index
    %7 = vector.load %arg8[%c0_5, %c0_6] : memref<1x128xf32, #tpu.memory_space<vmem>>, vector<1x128xf32>
    %c0_7 = arith.constant 0 : index
    %c0_8 = arith.constant 0 : index
    %8 = vector.load %arg9[%c0_7, %c0_8] : memref<1x128xf32, #tpu.memory_space<vmem>>, vector<1x128xf32>
    %cst_9 = arith.constant dense<0.000000e+00> : vector<16xf32>
    %9 = vector.multi_reduction <add>, %6, %cst_9 [1] : vector<16x128xf32> to vector<16xf32>
    %10 = vector.shape_cast %9 : vector<16xf32> to vector<16x1xf32>
    %11 = arith.mulf %6, %6 : vector<16x128xf32>
    %cst_10 = arith.constant dense<0.000000e+00> : vector<16xf32>
    %12 = vector.multi_reduction <add>, %11, %cst_10 [1] : vector<16x128xf32> to vector<16xf32>
    %13 = vector.shape_cast %12 : vector<16xf32> to vector<16x1xf32>
    %cst_11 = arith.constant 7.812500e-03 : f32
    %14 = vector.broadcast %cst_11 : f32 to vector<16x1xf32>
    %15 = arith.mulf %10, %14 : vector<16x1xf32>
    %cst_12 = arith.constant 7.812500e-03 : f32
    %16 = vector.broadcast %cst_12 : f32 to vector<16x1xf32>
    %17 = arith.mulf %13, %16 : vector<16x1xf32>
    %18 = arith.mulf %15, %15 : vector<16x1xf32>
    %19 = arith.subf %17, %18 : vector<16x1xf32>
    %cst_13 = arith.constant 0.000000e+00 : f32
    %20 = vector.broadcast %cst_13 : f32 to vector<16x1xf32>
    %21 = arith.maximumf %19, %20 : vector<16x1xf32>
    %22 = vector.broadcast %15 : vector<16x1xf32> to vector<16x128xf32>
    %23 = arith.subf %6, %22 : vector<16x128xf32>
    %cst_14 = arith.constant 9.99999974E-6 : f32
    %24 = vector.broadcast %cst_14 : f32 to vector<16x1xf32>
    %25 = arith.addf %21, %24 : vector<16x1xf32>
    %26 = math.rsqrt %25 : vector<16x1xf32>
    %27 = vector.broadcast %26 : vector<16x1xf32> to vector<16x128xf32>
    %28 = arith.mulf %23, %27 : vector<16x128xf32>
    %29 = vector.broadcast %7 : vector<1x128xf32> to vector<16x128xf32>
    %30 = arith.mulf %28, %29 : vector<16x128xf32>
    %31 = vector.broadcast %8 : vector<1x128xf32> to vector<16x128xf32>
    %32 = arith.addf %30, %31 : vector<16x128xf32>
    %33 = arith.truncf %32 : vector<16x128xf32> to vector<16x128xbf16>
    %c0_15 = arith.constant 0 : index
    %c0_16 = arith.constant 0 : index
    %34 = vector.load %arg4[%c0_15, %c0_16] : memref<128x384xbf16, #tpu.memory_space<vmem>>, vector<128x384xbf16>
    %cst_17 = arith.constant dense<0.000000e+00> : vector<16x384xf32>
    %35 = tpu.matmul %33, %34, %cst_17 {dimension_numbers = #tpu.dot_dimension_numbers<[1], [0], [0], [1], [0, 0, 1, 1], [], []>} : vector<16x128xbf16>, vector<128x384xbf16>, vector<16x384xf32> -> vector<16x384xf32>
    %c0_18 = arith.constant 0 : index
    %c0_19 = arith.constant 0 : index
    %36 = vector.load %arg5[%c0_18, %c0_19] : memref<1x384xf32, #tpu.memory_space<vmem>>, vector<1x384xf32>
    %37 = vector.broadcast %36 : vector<1x384xf32> to vector<16x384xf32>
    %38 = arith.addf %35, %37 : vector<16x384xf32>
    %39 = vector.extract_strided_slice %38 {offsets = [0, 0], sizes = [16, 128], strides = [1, 1]} : vector<16x384xf32> to vector<16x128xf32>
    %40 = vector.extract_strided_slice %38 {offsets = [0, 128], sizes = [16, 128], strides = [1, 1]} : vector<16x384xf32> to vector<16x128xf32>
    %41 = vector.extract_strided_slice %38 {offsets = [0, 256], sizes = [16, 128], strides = [1, 1]} : vector<16x384xf32> to vector<16x128xf32>
    %42 = vector.extract_strided_slice %39 {offsets = [0, 0], sizes = [8, 32], strides = [1, 1]} : vector<16x128xf32> to vector<8x32xf32>
    %43 = vector.extract_strided_slice %39 {offsets = [0, 32], sizes = [8, 32], strides = [1, 1]} : vector<16x128xf32> to vector<8x32xf32>
    %44 = vector.extract_strided_slice %39 {offsets = [0, 64], sizes = [8, 32], strides = [1, 1]} : vector<16x128xf32> to vector<8x32xf32>
    %45 = vector.extract_strided_slice %39 {offsets = [0, 96], sizes = [8, 32], strides = [1, 1]} : vector<16x128xf32> to vector<8x32xf32>
    %46 = vector.extract_strided_slice %39 {offsets = [8, 0], sizes = [8, 32], strides = [1, 1]} : vector<16x128xf32> to vector<8x32xf32>
    %47 = vector.extract_strided_slice %39 {offsets = [8, 32], sizes = [8, 32], strides = [1, 1]} : vector<16x128xf32> to vector<8x32xf32>
    %48 = vector.extract_strided_slice %39 {offsets = [8, 64], sizes = [8, 32], strides = [1, 1]} : vector<16x128xf32> to vector<8x32xf32>
    %49 = vector.extract_strided_slice %39 {offsets = [8, 96], sizes = [8, 32], strides = [1, 1]} : vector<16x128xf32> to vector<8x32xf32>
    %50 = tpu.concatenate %42, %43, %44, %45, %46, %47, %48, %49 in 0 : vector<8x32xf32>, vector<8x32xf32>, vector<8x32xf32>, vector<8x32xf32>, vector<8x32xf32>, vector<8x32xf32>, vector<8x32xf32>, vector<8x32xf32> -> vector<64x32xf32>
    %51 = vector.shape_cast %50 : vector<64x32xf32> to vector<8x8x32xf32>
    %52 = arith.truncf %51 : vector<8x8x32xf32> to vector<8x8x32xbf16>
    %53 = vector.extract_strided_slice %40 {offsets = [0, 0], sizes = [8, 32], strides = [1, 1]} : vector<16x128xf32> to vector<8x32xf32>
    %54 = vector.extract_strided_slice %40 {offsets = [0, 32], sizes = [8, 32], strides = [1, 1]} : vector<16x128xf32> to vector<8x32xf32>
    %55 = vector.extract_strided_slice %40 {offsets = [0, 64], sizes = [8, 32], strides = [1, 1]} : vector<16x128xf32> to vector<8x32xf32>
    %56 = vector.extract_strided_slice %40 {offsets = [0, 96], sizes = [8, 32], strides = [1, 1]} : vector<16x128xf32> to vector<8x32xf32>
    %57 = vector.extract_strided_slice %40 {offsets = [8, 0], sizes = [8, 32], strides = [1, 1]} : vector<16x128xf32> to vector<8x32xf32>
    %58 = vector.extract_strided_slice %40 {offsets = [8, 32], sizes = [8, 32], strides = [1, 1]} : vector<16x128xf32> to vector<8x32xf32>
    %59 = vector.extract_strided_slice %40 {offsets = [8, 64], sizes = [8, 32], strides = [1, 1]} : vector<16x128xf32> to vector<8x32xf32>
    %60 = vector.extract_strided_slice %40 {offsets = [8, 96], sizes = [8, 32], strides = [1, 1]} : vector<16x128xf32> to vector<8x32xf32>
    %61 = tpu.concatenate %53, %54, %55, %56, %57, %58, %59, %60 in 0 : vector<8x32xf32>, vector<8x32xf32>, vector<8x32xf32>, vector<8x32xf32>, vector<8x32xf32>, vector<8x32xf32>, vector<8x32xf32>, vector<8x32xf32> -> vector<64x32xf32>
    %62 = vector.shape_cast %61 : vector<64x32xf32> to vector<8x8x32xf32>
    %63 = arith.truncf %62 : vector<8x8x32xf32> to vector<8x8x32xbf16>
    %64 = vector.extract_strided_slice %41 {offsets = [0, 0], sizes = [8, 32], strides = [1, 1]} : vector<16x128xf32> to vector<8x32xf32>
    %65 = vector.extract_strided_slice %41 {offsets = [0, 32], sizes = [8, 32], strides = [1, 1]} : vector<16x128xf32> to vector<8x32xf32>
    %66 = vector.extract_strided_slice %41 {offsets = [0, 64], sizes = [8, 32], strides = [1, 1]} : vector<16x128xf32> to vector<8x32xf32>
    %67 = vector.extract_strided_slice %41 {offsets = [0, 96], sizes = [8, 32], strides = [1, 1]} : vector<16x128xf32> to vector<8x32xf32>
    %68 = vector.extract_strided_slice %41 {offsets = [8, 0], sizes = [8, 32], strides = [1, 1]} : vector<16x128xf32> to vector<8x32xf32>
    %69 = vector.extract_strided_slice %41 {offsets = [8, 32], sizes = [8, 32], strides = [1, 1]} : vector<16x128xf32> to vector<8x32xf32>
    %70 = vector.extract_strided_slice %41 {offsets = [8, 64], sizes = [8, 32], strides = [1, 1]} : vector<16x128xf32> to vector<8x32xf32>
    %71 = vector.extract_strided_slice %41 {offsets = [8, 96], sizes = [8, 32], strides = [1, 1]} : vector<16x128xf32> to vector<8x32xf32>
    %72 = tpu.concatenate %64, %65, %66, %67, %68, %69, %70, %71 in 0 : vector<8x32xf32>, vector<8x32xf32>, vector<8x32xf32>, vector<8x32xf32>, vector<8x32xf32>, vector<8x32xf32>, vector<8x32xf32>, vector<8x32xf32> -> vector<64x32xf32>
    %73 = vector.shape_cast %72 : vector<64x32xf32> to vector<8x8x32xf32>
    %74 = arith.truncf %73 : vector<8x8x32xf32> to vector<8x8x32xbf16>
    "tpu.trace_start"() <{level = 10 : i32, message = "gqd,gkd->gqk"}> : () -> ()
    %cst_20 = arith.constant dense<0.000000e+00> : vector<8x8x8xf32>
    %75 = tpu.matmul %52, %63, %cst_20 {dimension_numbers = #tpu.dot_dimension_numbers<[2], [2], [1], [1], [0, 0, 0, 1, 1, 1], [0], [0]>} : vector<8x8x32xbf16>, vector<8x8x32xbf16>, vector<8x8x8xf32> -> vector<8x8x8xf32>
    "tpu.trace_stop"() : () -> ()
    %cst_21 = arith.constant dense<0xFF800000> : vector<8x8xf32>
    %76 = vector.multi_reduction <maximumf>, %75, %cst_21 [2] : vector<8x8x8xf32> to vector<8x8xf32>
    %77 = vector.shape_cast %76 : vector<8x8xf32> to vector<8x8x1xf32>
    %78 = vector.broadcast %77 : vector<8x8x1xf32> to vector<8x8x8xf32>
    %79 = arith.subf %75, %78 : vector<8x8x8xf32>
    %80 = math.exp %79 : vector<8x8x8xf32>
    %cst_22 = arith.constant dense<0.000000e+00> : vector<8x8xf32>
    %81 = vector.multi_reduction <add>, %80, %cst_22 [2] : vector<8x8x8xf32> to vector<8x8xf32>
    %82 = vector.shape_cast %81 : vector<8x8xf32> to vector<8x8x1xf32>
    %83 = tpu.reciprocal %82 {approx = true} : vector<8x8x1xf32> -> vector<8x8x1xf32>
    %84 = vector.broadcast %83 : vector<8x8x1xf32> to vector<8x8x8xf32>
    %85 = arith.mulf %80, %84 : vector<8x8x8xf32>
    %86 = arith.truncf %85 : vector<8x8x8xf32> to vector<8x8x8xbf16>
    "tpu.trace_start"() <{level = 10 : i32, message = "gqk,gkd->gqd"}> : () -> ()
    %cst_23 = arith.constant dense<0.000000e+00> : vector<8x8x32xf32>
    %87 = tpu.matmul %86, %74, %cst_23 {dimension_numbers = #tpu.dot_dimension_numbers<[2], [1], [1], [2], [0, 0, 0, 1, 1, 2], [0], [0]>} : vector<8x8x8xbf16>, vector<8x8x32xbf16>, vector<8x8x32xf32> -> vector<8x8x32xf32>
    "tpu.trace_stop"() : () -> ()
    %88 = vector.extract_strided_slice %87 {offsets = [0, 0, 0], sizes = [1, 8, 32], strides = [1, 1, 1]} : vector<8x8x32xf32> to vector<1x8x32xf32>
    %89 = vector.shape_cast %88 : vector<1x8x32xf32> to vector<8x32xf32>
    %90 = vector.extract_strided_slice %87 {offsets = [1, 0, 0], sizes = [1, 8, 32], strides = [1, 1, 1]} : vector<8x8x32xf32> to vector<1x8x32xf32>
    %91 = vector.shape_cast %90 : vector<1x8x32xf32> to vector<8x32xf32>
    %92 = vector.extract_strided_slice %87 {offsets = [2, 0, 0], sizes = [1, 8, 32], strides = [1, 1, 1]} : vector<8x8x32xf32> to vector<1x8x32xf32>
    %93 = vector.shape_cast %92 : vector<1x8x32xf32> to vector<8x32xf32>
    %94 = vector.extract_strided_slice %87 {offsets = [3, 0, 0], sizes = [1, 8, 32], strides = [1, 1, 1]} : vector<8x8x32xf32> to vector<1x8x32xf32>
    %95 = vector.shape_cast %94 : vector<1x8x32xf32> to vector<8x32xf32>
    %96 = tpu.concatenate %89, %91, %93, %95 in 1 : vector<8x32xf32>, vector<8x32xf32>, vector<8x32xf32>, vector<8x32xf32> -> vector<8x128xf32>
    %97 = vector.extract_strided_slice %87 {offsets = [4, 0, 0], sizes = [1, 8, 32], strides = [1, 1, 1]} : vector<8x8x32xf32> to vector<1x8x32xf32>
    %98 = vector.shape_cast %97 : vector<1x8x32xf32> to vector<8x32xf32>
    %99 = vector.extract_strided_slice %87 {offsets = [5, 0, 0], sizes = [1, 8, 32], strides = [1, 1, 1]} : vector<8x8x32xf32> to vector<1x8x32xf32>
    %100 = vector.shape_cast %99 : vector<1x8x32xf32> to vector<8x32xf32>
    %101 = vector.extract_strided_slice %87 {offsets = [6, 0, 0], sizes = [1, 8, 32], strides = [1, 1, 1]} : vector<8x8x32xf32> to vector<1x8x32xf32>
    %102 = vector.shape_cast %101 : vector<1x8x32xf32> to vector<8x32xf32>
    %103 = vector.extract_strided_slice %87 {offsets = [7, 0, 0], sizes = [1, 8, 32], strides = [1, 1, 1]} : vector<8x8x32xf32> to vector<1x8x32xf32>
    %104 = vector.shape_cast %103 : vector<1x8x32xf32> to vector<8x32xf32>
    %105 = tpu.concatenate %98, %100, %102, %104 in 1 : vector<8x32xf32>, vector<8x32xf32>, vector<8x32xf32>, vector<8x32xf32> -> vector<8x128xf32>
    %106 = tpu.concatenate %96, %105 in 0 : vector<8x128xf32>, vector<8x128xf32> -> vector<16x128xf32>
    %107 = arith.truncf %106 : vector<16x128xf32> to vector<16x128xbf16>
    %c0_24 = arith.constant 0 : index
    %c0_25 = arith.constant 0 : index
    %108 = vector.load %arg6[%c0_24, %c0_25] : memref<128x128xbf16, #tpu.memory_space<vmem>>, vector<128x128xbf16>
    %cst_26 = arith.constant dense<0.000000e+00> : vector<16x128xf32>
    %109 = tpu.matmul %107, %108, %cst_26 {dimension_numbers = #tpu.dot_dimension_numbers<[1], [0], [0], [1], [0, 0, 1, 1], [], []>} : vector<16x128xbf16>, vector<128x128xbf16>, vector<16x128xf32> -> vector<16x128xf32>
    %c0_27 = arith.constant 0 : index
    %c0_28 = arith.constant 0 : index
    %110 = vector.load %arg7[%c0_27, %c0_28] : memref<1x128xf32, #tpu.memory_space<vmem>>, vector<1x128xf32>
    %111 = vector.broadcast %110 : vector<1x128xf32> to vector<16x128xf32>
    %112 = arith.addf %109, %111 : vector<16x128xf32>
    %113 = arith.addf %6, %112 : vector<16x128xf32>
    %c0_29 = arith.constant 0 : index
    %c0_30 = arith.constant 0 : index
    %114 = vector.load %arg14[%c0_29, %c0_30] : memref<1x128xf32, #tpu.memory_space<vmem>>, vector<1x128xf32>
    %c0_31 = arith.constant 0 : index
    %c0_32 = arith.constant 0 : index
    %115 = vector.load %arg15[%c0_31, %c0_32] : memref<1x128xf32, #tpu.memory_space<vmem>>, vector<1x128xf32>
    %cst_33 = arith.constant dense<0.000000e+00> : vector<16xf32>
    %116 = vector.multi_reduction <add>, %113, %cst_33 [1] : vector<16x128xf32> to vector<16xf32>
    %117 = vector.shape_cast %116 : vector<16xf32> to vector<16x1xf32>
    %118 = arith.mulf %113, %113 : vector<16x128xf32>
    %cst_34 = arith.constant dense<0.000000e+00> : vector<16xf32>
    %119 = vector.multi_reduction <add>, %118, %cst_34 [1] : vector<16x128xf32> to vector<16xf32>
    %120 = vector.shape_cast %119 : vector<16xf32> to vector<16x1xf32>
    %cst_35 = arith.constant 7.812500e-03 : f32
    %121 = vector.broadcast %cst_35 : f32 to vector<16x1xf32>
    %122 = arith.mulf %117, %121 : vector<16x1xf32>
    %cst_36 = arith.constant 7.812500e-03 : f32
    %123 = vector.broadcast %cst_36 : f32 to vector<16x1xf32>
    %124 = arith.mulf %120, %123 : vector<16x1xf32>
    %125 = arith.mulf %122, %122 : vector<16x1xf32>
    %126 = arith.subf %124, %125 : vector<16x1xf32>
    %cst_37 = arith.constant 0.000000e+00 : f32
    %127 = vector.broadcast %cst_37 : f32 to vector<16x1xf32>
    %128 = arith.maximumf %126, %127 : vector<16x1xf32>
    %129 = vector.broadcast %122 : vector<16x1xf32> to vector<16x128xf32>
    %130 = arith.subf %113, %129 : vector<16x128xf32>
    %cst_38 = arith.constant 9.99999974E-6 : f32
    %131 = vector.broadcast %cst_38 : f32 to vector<16x1xf32>
    %132 = arith.addf %128, %131 : vector<16x1xf32>
    %133 = math.rsqrt %132 : vector<16x1xf32>
    %134 = vector.broadcast %133 : vector<16x1xf32> to vector<16x128xf32>
    %135 = arith.mulf %130, %134 : vector<16x128xf32>
    %136 = vector.broadcast %114 : vector<1x128xf32> to vector<16x128xf32>
    %137 = arith.mulf %135, %136 : vector<16x128xf32>
    %138 = vector.broadcast %115 : vector<1x128xf32> to vector<16x128xf32>
    %139 = arith.addf %137, %138 : vector<16x128xf32>
    %140 = arith.truncf %139 : vector<16x128xf32> to vector<16x128xbf16>
    %c0_39 = arith.constant 0 : index
    %c0_40 = arith.constant 0 : index
    %141 = vector.load %arg10[%c0_39, %c0_40] : memref<128x512xbf16, #tpu.memory_space<vmem>>, vector<128x512xbf16>
    %cst_41 = arith.constant dense<0.000000e+00> : vector<16x512xf32>
    %142 = tpu.matmul %140, %141, %cst_41 {dimension_numbers = #tpu.dot_dimension_numbers<[1], [0], [0], [1], [0, 0, 1, 1], [], []>} : vector<16x128xbf16>, vector<128x512xbf16>, vector<16x512xf32> -> vector<16x512xf32>
    %c0_42 = arith.constant 0 : index
    %c0_43 = arith.constant 0 : index
    %143 = vector.load %arg11[%c0_42, %c0_43] : memref<1x512xf32, #tpu.memory_space<vmem>>, vector<1x512xf32>
    %144 = vector.broadcast %143 : vector<1x512xf32> to vector<16x512xf32>
    %145 = arith.addf %142, %144 : vector<16x512xf32>
    %cst_44 = arith.constant 0.000000e+00 : f32
    %146 = vector.broadcast %cst_44 : f32 to vector<16x512xf32>
    %147 = arith.maximumf %145, %146 : vector<16x512xf32>
    %148 = arith.truncf %147 : vector<16x512xf32> to vector<16x512xbf16>
    %c0_45 = arith.constant 0 : index
    %c0_46 = arith.constant 0 : index
    %149 = vector.load %arg12[%c0_45, %c0_46] : memref<512x128xbf16, #tpu.memory_space<vmem>>, vector<512x128xbf16>
    %cst_47 = arith.constant dense<0.000000e+00> : vector<16x128xf32>
    %150 = tpu.matmul %148, %149, %cst_47 {dimension_numbers = #tpu.dot_dimension_numbers<[1], [0], [0], [1], [0, 0, 1, 1], [], []>} : vector<16x512xbf16>, vector<512x128xbf16>, vector<16x128xf32> -> vector<16x128xf32>
    %c0_48 = arith.constant 0 : index
    %c0_49 = arith.constant 0 : index
    %151 = vector.load %arg13[%c0_48, %c0_49] : memref<1x128xf32, #tpu.memory_space<vmem>>, vector<1x128xf32>
    %152 = vector.broadcast %151 : vector<1x128xf32> to vector<16x128xf32>
    %153 = arith.addf %150, %152 : vector<16x128xf32>
    %154 = arith.addf %113, %153 : vector<16x128xf32>
    %155 = arith.truncf %154 : vector<16x128xf32> to vector<16x128xbf16>
    %c0_50 = arith.constant 0 : index
    %c0_51 = arith.constant 0 : index
    %156 = vector.load %arg16[%c0_50, %c0_51] : memref<128x128xbf16, #tpu.memory_space<vmem>>, vector<128x128xbf16>
    %cst_52 = arith.constant dense<0.000000e+00> : vector<16x128xf32>
    %157 = tpu.matmul %155, %156, %cst_52 {dimension_numbers = #tpu.dot_dimension_numbers<[1], [0], [0], [1], [0, 0, 1, 1], [], []>} : vector<16x128xbf16>, vector<128x128xbf16>, vector<16x128xf32> -> vector<16x128xf32>
    %c0_53 = arith.constant 0 : index
    %c0_54 = arith.constant 0 : index
    %158 = vector.load %arg17[%c0_53, %c0_54] : memref<1x128xf32, #tpu.memory_space<vmem>>, vector<1x128xf32>
    %159 = vector.broadcast %158 : vector<1x128xf32> to vector<16x128xf32>
    %160 = arith.addf %157, %159 : vector<16x128xf32>
    %c0_55 = arith.constant 0 : index
    %c0_56 = arith.constant 0 : index
    %161 = vector.load %arg18[%c0_55, %c0_56] : memref<16x128xf32, #tpu.memory_space<vmem>>, vector<16x128xf32>
    tpu.vector_store %arg18[%c0_55, %c0_56], %160 {strides = array<i32>} : memref<16x128xf32, #tpu.memory_space<vmem>>, vector<16x128xf32>,
    return
  }
  func.func @transform_0(%arg0: i32) -> (i32, i32) {
    %c0_i32 = arith.constant 0 : i32
    %c0_i32_0 = arith.constant 0 : i32
    return %arg0, %c0_i32 : i32, i32
  }
  func.func @transform_1(%arg0: i32) -> (i32, i32) {
    %c0_i32 = arith.constant 0 : i32
    %c0_i32_0 = arith.constant 0 : i32
    %c0_i32_1 = arith.constant 0 : i32
    return %c0_i32, %c0_i32_0 : i32, i32
  }
  func.func @transform_2(%arg0: i32) -> (i32, i32) {
    %c0_i32 = arith.constant 0 : i32
    %c0_i32_0 = arith.constant 0 : i32
    %c0_i32_1 = arith.constant 0 : i32
    return %c0_i32, %c0_i32_0 : i32, i32
  }
  func.func @transform_3(%arg0: i32) -> (i32, i32) {
    %c0_i32 = arith.constant 0 : i32
    %c0_i32_0 = arith.constant 0 : i32
    %c0_i32_1 = arith.constant 0 : i32
    return %c0_i32, %c0_i32_0 : i32, i32
  }
  func.func @transform_4(%arg0: i32) -> (i32, i32) {
    %c0_i32 = arith.constant 0 : i32
    %c0_i32_0 = arith.constant 0 : i32
    %c0_i32_1 = arith.constant 0 : i32
    return %c0_i32, %c0_i32_0 : i32, i32
  }
  func.func @transform_5(%arg0: i32) -> (i32, i32) {
    %c0_i32 = arith.constant 0 : i32
    %c0_i32_0 = arith.constant 0 : i32
    %c0_i32_1 = arith.constant 0 : i32
    return %c0_i32, %c0_i32_0 : i32, i32
  }
  func.func @transform_6(%arg0: i32) -> (i32, i32) {
    %c0_i32 = arith.constant 0 : i32
    %c0_i32_0 = arith.constant 0 : i32
    %c0_i32_1 = arith.constant 0 : i32
    return %c0_i32, %c0_i32_0 : i32, i32
  }
  func.func @transform_7(%arg0: i32) -> (i32, i32) {
    %c0_i32 = arith.constant 0 : i32
    %c0_i32_0 = arith.constant 0 : i32
    %c0_i32_1 = arith.constant 0 : i32
    return %c0_i32, %c0_i32_0 : i32, i32
  }
  func.func @transform_8(%arg0: i32) -> (i32, i32) {
    %c0_i32 = arith.constant 0 : i32
    %c0_i32_0 = arith.constant 0 : i32
    %c0_i32_1 = arith.constant 0 : i32
    return %c0_i32, %c0_i32_0 : i32, i32
  }
  func.func @transform_9(%arg0: i32) -> (i32, i32) {
    %c0_i32 = arith.constant 0 : i32
    %c0_i32_0 = arith.constant 0 : i32
    %c0_i32_1 = arith.constant 0 : i32
    return %c0_i32, %c0_i32_0 : i32, i32
  }
  func.func @transform_10(%arg0: i32) -> (i32, i32) {
    %c0_i32 = arith.constant 0 : i32
    %c0_i32_0 = arith.constant 0 : i32
    %c0_i32_1 = arith.constant 0 : i32
    return %c0_i32, %c0_i32_0 : i32, i32
  }
  func.func @transform_11(%arg0: i32) -> (i32, i32) {
    %c0_i32 = arith.constant 0 : i32
    %c0_i32_0 = arith.constant 0 : i32
    %c0_i32_1 = arith.constant 0 : i32
    return %c0_i32, %c0_i32_0 : i32, i32
  }
  func.func @transform_12(%arg0: i32) -> (i32, i32) {
    %c0_i32 = arith.constant 0 : i32
    %c0_i32_0 = arith.constant 0 : i32
    %c0_i32_1 = arith.constant 0 : i32
    return %c0_i32, %c0_i32_0 : i32, i32
  }
  func.func @transform_13(%arg0: i32) -> (i32, i32) {
    %c0_i32 = arith.constant 0 : i32
    %c0_i32_0 = arith.constant 0 : i32
    %c0_i32_1 = arith.constant 0 : i32
    return %c0_i32, %c0_i32_0 : i32, i32
  }
  func.func @transform_14(%arg0: i32) -> (i32, i32) {
    %c0_i32 = arith.constant 0 : i32
    %c0_i32_0 = arith.constant 0 : i32
    %c0_i32_1 = arith.constant 0 : i32
    return %c0_i32, %c0_i32_0 : i32, i32
  }
  func.func @transform_15(%arg0: i32) -> (i32, i32) {
    %c0_i32 = arith.constant 0 : i32
    %c0_i32_0 = arith.constant 0 : i32
    %c0_i32_1 = arith.constant 0 : i32
    return %c0_i32, %c0_i32_0 : i32, i32
  }
  func.func @transform_16(%arg0: i32) -> (i32, i32) {
    %c0_i32 = arith.constant 0 : i32
    %c0_i32_0 = arith.constant 0 : i32
    %c0_i32_1 = arith.constant 0 : i32
    return %c0_i32, %c0_i32_0 : i32, i32
  }
  func.func @transform_17(%arg0: i32) -> (i32, i32) {
    %c0_i32 = arith.constant 0 : i32
    %c0_i32_0 = arith.constant 0 : i32
    return %arg0, %c0_i32 : i32, i32
  }
}

</mosaic_0001>

<llo_original>
// kernel: tpu_custom_call.1
$region0: #{tpu_custom_call.1}
  #allocation0 [shape = 'u32[]', space=smem, size = 0x4, offset = 0x4, fixed_abs, tag = 'smem constant byte address 0x4 - core index']
  #allocation1 [shape = 'u32[144,128]{1,0:T(1,128)}', space=vmem, size = 0x12000, scoped, tag = 'internal scratch']
  %s0 = inlined_call_operand.hbm [shape: f32[16,128], index: 0, kind: input, shape index: {}]
  %s1 = inlined_call_operand.hbm [shape: bf16[128,128], index: 1, kind: input, shape index: {}]
  %s2 = inlined_call_operand.hbm [shape: f32[1,128], index: 2, kind: input, shape index: {}]
  %s3 = inlined_call_operand.hbm [shape: bf16[128,384], index: 3, kind: input, shape index: {}]
  %s4 = inlined_call_operand.vmem [shape: f32[1,384], index: 4, kind: input, shape index: {}]
  %s5 = inlined_call_operand.hbm [shape: bf16[128,128], index: 5, kind: input, shape index: {}]
  %s6 = inlined_call_operand.vmem [shape: f32[1,128], index: 6, kind: input, shape index: {}]
  %s7 = inlined_call_operand.vmem [shape: f32[1,128], index: 7, kind: input, shape index: {}]
  %s8 = inlined_call_operand.vmem [shape: f32[1,128], index: 8, kind: input, shape index: {}]
  %s9 = inlined_call_operand.hbm [shape: bf16[128,512], index: 9, kind: input, shape index: {}]
  %s10 = inlined_call_operand.vmem [shape: f32[1,512], index: 10, kind: input, shape index: {}]
  %s11 = inlined_call_operand.hbm [shape: bf16[512,128], index: 11, kind: input, shape index: {}]
  %s12 = inlined_call_operand.vmem [shape: f32[1,128], index: 12, kind: input, shape index: {}]
  %s13 = inlined_call_operand.vmem [shape: f32[1,128], index: 13, kind: input, shape index: {}]
  %s14 = inlined_call_operand.vmem [shape: f32[1,128], index: 14, kind: input, shape index: {}]
  %s15 = inlined_call_operand.hbm [shape: bf16[128,128], index: 15, kind: input, shape index: {}]
  %s16 = inlined_call_operand.vmem [shape: f32[1,128], index: 16, kind: input, shape index: {}]
  %s17 = inlined_call_operand.hbm [shape: f32[16,128], index: 17, kind: output, shape index: {}]
  %s18 = sld [smem:[#allocation0]]
  $region110: #{tpu_custom_call.1} parent=0
    _
  %s20 = ssub.s32 1, %s18
  %s21 = scalar_select 0, %s20, %s18
  $region1: #{tpu_custom_call.1} parent=0
    #allocation2 [shape = 'u8[8192]{0}', space=vmem, size = 0x2000, scoped, tag = 'input window, operand 0, single buffered']
    #allocation3 [shape = 's32[1]{0}', space=sflag, size = 0x4, scoped, tag = 'scoped memory for tpu_custom_call.1']
    #allocation4 [shape = 's32[1]{0}', space=sflag, size = 0x4, scoped, tag = 'scoped memory for tpu_custom_call.1']
    #allocation5 [shape = 'u8[32768]{0}', space=vmem, size = 0x8000, scoped, tag = 'input window, operand 1, single buffered']
    #allocation6 [shape = 's32[1]{0}', space=sflag, size = 0x4, scoped, tag = 'scoped memory for tpu_custom_call.1']
    #allocation7 [shape = 'u8[512]{0}', space=vmem, size = 0x400, scoped, tag = 'input window, operand 2, single buffered']
    #allocation8 [shape = 'u8[98304]{0}', space=vmem, size = 0x18000, scoped, tag = 'input window, operand 3, single buffered']
    #allocation9 [shape = 's32[1]{0}', space=sflag, size = 0x4, scoped, tag = 'scoped memory for tpu_custom_call.1']
    #allocation10 [shape = 'u8[32768]{0}', space=vmem, size = 0x8000, scoped, tag = 'input window, operand 5, single buffered']
    #allocation11 [shape = 'u8[131072]{0}', space=vmem, size = 0x20000, scoped, tag = 'input window, operand 9, single buffered']
    #allocation12 [shape = 's32[1]{0}', space=sflag, size = 0x4, scoped, tag = 'scoped memory for tpu_custom_call.1']
    #allocation13 [shape = 'u8[131072]{0}', space=vmem, size = 0x20000, scoped, tag = 'input window, operand 11, single buffered']
    #allocation14 [shape = 'u8[32768]{0}', space=vmem, size = 0x8000, scoped, tag = 'input window, operand 15, single buffered']
    #allocation15 [shape = 's32[1]{0}', space=sflag, size = 0x4, scoped, tag = 'scoped memory for tpu_custom_call.1']
    #allocation16 [shape = 'u8[8192]{0}', space=vmem, size = 0x2000, scoped, tag = 'output window, operand 0, single buffered']
    %22 = vsyncpa [#allocation3], 0
    %23 = vsyncpa [#allocation6], 0
    %24 = vsyncpa [#allocation9], 0
    %25 = vsyncpa [#allocation12], 0
    %26 = vsyncpa [#allocation15], 0
    %27 = vsyncpa [#allocation4], 0
    // Predicated region
    $region2: #{tpu_custom_call.1} parent=1 // pred_check
      _
    $region3: #{tpu_custom_call.1} parent=1 // pred_check_branch
      %29 = sbr.rel (0) target = $region5
    $region4: #{tpu_custom_call.1} parent=1 // pred_region
      %s31 = ssub.s32 256, 256
      %32 = vsyncadd [#allocation3], %s31
      %s33 = sshll.u32 [#allocation2], 4
      %s34 = int_to_ptr.vmem [resolvable:$true] %s33
      %39 = dma.hbm_to_vmem [thread:$0]  %s0, 256, %s34, [#allocation3], 128, 128, 8
    $region5: #{tpu_custom_call.1} parent=1 // pred_fallthru
      _
    // Predicated region
    $region6: #{tpu_custom_call.1} parent=1 // pred_check
      _
    $region7: #{tpu_custom_call.1} parent=1 // pred_check_branch
      %41 = sbr.rel (0) target = $region9
    $region8: #{tpu_custom_call.1} parent=1 // pred_region
      %s43 = ssub.s32 1024, 1024
      %44 = vsyncadd [#allocation6], %s43
      %s45 = sshll.u32 [#allocation5], 4
      %s46 = int_to_ptr.vmem [resolvable:$true] %s45
      %51 = dma.hbm_to_vmem [thread:$0]  %s1, 1024, %s46, [#allocation6], 64, 64, 4
    $region9: #{tpu_custom_call.1} parent=1 // pred_fallthru
      _
    // Predicated region
    $region10: #{tpu_custom_call.1} parent=1 // pred_check
      _
    $region11: #{tpu_custom_call.1} parent=1 // pred_check_branch
      %53 = sbr.rel (0) target = $region13
    $region12: #{tpu_custom_call.1} parent=1 // pred_region
      %s55 = ssub.s32 16, 16
      %56 = vsyncadd [#allocation6], %s55
      %s58 = sshll.u32 [#allocation7], 4
      %s59 = int_to_ptr.vmem [resolvable:$true] %s58
      %61 = dma.hbm_to_vmem [thread:$0]  %s2, 16, %s59, [#allocation6]
    $region13: #{tpu_custom_call.1} parent=1 // pred_fallthru
      _
    // Predicated region
    $region14: #{tpu_custom_call.1} parent=1 // pred_check
      _
    $region15: #{tpu_custom_call.1} parent=1 // pred_check_branch
      %63 = sbr.rel (0) target = $region17
    $region16: #{tpu_custom_call.1} parent=1 // pred_region
      %s65 = ssub.s32 3072, 3072
      %66 = vsyncadd [#allocation9], %s65
      %s67 = sshll.u32 [#allocation8], 4
      %s68 = int_to_ptr.vmem [resolvable:$true] %s67
      %73 = dma.hbm_to_vmem [thread:$0]  %s3, 3072, %s68, [#allocation9], 192, 192, 12
    $region17: #{tpu_custom_call.1} parent=1 // pred_fallthru
      _
    // Predicated region
    $region18: #{tpu_custom_call.1} parent=1 // pred_check
      _
    $region19: #{tpu_custom_call.1} parent=1 // pred_check_branch
      %75 = sbr.rel (0) target = $region21
    $region20: #{tpu_custom_call.1} parent=1 // pred_region
      _
    $region21: #{tpu_custom_call.1} parent=1 // pred_fallthru
      _
    // Predicated region
    $region22: #{tpu_custom_call.1} parent=1 // pred_check
      _
    $region23: #{tpu_custom_call.1} parent=1 // pred_check_branch
      %77 = sbr.rel (0) target = $region25
    $region24: #{tpu_custom_call.1} parent=1 // pred_region
      %s79 = ssub.s32 1024, 1024
      %80 = vsyncadd [#allocation9], %s79
      %s81 = sshll.u32 [#allocation10], 4
      %s82 = int_to_ptr.vmem [resolvable:$true] %s81
      %87 = dma.hbm_to_vmem [thread:$0]  %s5, 1024, %s82, [#allocation9], 64, 64, 4
    $region25: #{tpu_custom_call.1} parent=1 // pred_fallthru
      _
    // Predicated region
    $region26: #{tpu_custom_call.1} parent=1 // pred_check
      _
    $region27: #{tpu_custom_call.1} parent=1 // pred_check_branch
      %89 = sbr.rel (0) target = $region29
    $region28: #{tpu_custom_call.1} parent=1 // pred_region
      _
    $region29: #{tpu_custom_call.1} parent=1 // pred_fallthru
      _
    // Predicated region
    $region30: #{tpu_custom_call.1} parent=1 // pred_check
      _
    $region31: #{tpu_custom_call.1} parent=1 // pred_check_branch
      %91 = sbr.rel (0) target = $region33
    $region32: #{tpu_custom_call.1} parent=1 // pred_region
      _
    $region33: #{tpu_custom_call.1} parent=1 // pred_fallthru
      _
    // Predicated region
    $region34: #{tpu_custom_call.1} parent=1 // pred_check
      _
    $region35: #{tpu_custom_call.1} parent=1 // pred_check_branch
      %93 = sbr.rel (0) target = $region37
    $region36: #{tpu_custom_call.1} parent=1 // pred_region
      _
    $region37: #{tpu_custom_call.1} parent=1 // pred_fallthru
      _
    // Predicated region
    $region38: #{tpu_custom_call.1} parent=1 // pred_check
      _
    $region39: #{tpu_custom_call.1} parent=1 // pred_check_branch
      %95 = sbr.rel (0) target = $region41
    $region40: #{tpu_custom_call.1} parent=1 // pred_region
      %s97 = ssub.s32 4096, 4096
      %98 = vsyncadd [#allocation12], %s97
      %s99 = sshll.u32 [#allocation11], 4
      %s100 = int_to_ptr.vmem [resolvable:$true] %s99
      %105 = dma.hbm_to_vmem [thread:$0]  %s9, 4096, %s100, [#allocation12], 256, 256, 16
    $region41: #{tpu_custom_call.1} parent=1 // pred_fallthru
      _
    // Predicated region
    $region42: #{tpu_custom_call.1} parent=1 // pred_check
      _
    $region43: #{tpu_custom_call.1} parent=1 // pred_check_branch
      %107 = sbr.rel (0) target = $region45
    $region44: #{tpu_custom_call.1} parent=1 // pred_region
      _
    $region45: #{tpu_custom_call.1} parent=1 // pred_fallthru
      _
    // Predicated region
    $region46: #{tpu_custom_call.1} parent=1 // pred_check
      _
    $region47: #{tpu_custom_call.1} parent=1 // pred_check_branch
      %109 = sbr.rel (0) target = $region49
    $region48: #{tpu_custom_call.1} parent=1 // pred_region
      %s111 = ssub.s32 4096, 4096
      %112 = vsyncadd [#allocation12], %s111
      %s113 = sshll.u32 [#allocation13], 4
      %s114 = int_to_ptr.vmem [resolvable:$true] %s113
      %119 = dma.hbm_to_vmem [thread:$0]  %s11, 4096, %s114, [#allocation12], 64, 64, 4
    $region49: #{tpu_custom_call.1} parent=1 // pred_fallthru
      _
    // Predicated region
    $region50: #{tpu_custom_call.1} parent=1 // pred_check
      _
    $region51: #{tpu_custom_call.1} parent=1 // pred_check_branch
      %121 = sbr.rel (0) target = $region53
    $region52: #{tpu_custom_call.1} parent=1 // pred_region
      _
    $region53: #{tpu_custom_call.1} parent=1 // pred_fallthru
      _
    // Predicated region
    $region54: #{tpu_custom_call.1} parent=1 // pred_check
      _
    $region55: #{tpu_custom_call.1} parent=1 // pred_check_branch
      %123 = sbr.rel (0) target = $region57
    $region56: #{tpu_custom_call.1} parent=1 // pred_region
      _
    $region57: #{tpu_custom_call.1} parent=1 // pred_fallthru
      _
    // Predicated region
    $region58: #{tpu_custom_call.1} parent=1 // pred_check
      _
    $region59: #{tpu_custom_call.1} parent=1 // pred_check_branch
      %125 = sbr.rel (0) target = $region61
    $region60: #{tpu_custom_call.1} parent=1 // pred_region
      _
    $region61: #{tpu_custom_call.1} parent=1 // pred_fallthru
      _
    // Predicated region
    $region62: #{tpu_custom_call.1} parent=1 // pred_check
      _
    $region63: #{tpu_custom_call.1} parent=1 // pred_check_branch
      %127 = sbr.rel (0) target = $region65
    $region64: #{tpu_custom_call.1} parent=1 // pred_region
      %s129 = ssub.s32 1024, 1024
      %130 = vsyncadd [#allocation15], %s129
      %s131 = sshll.u32 [#allocation14], 4
      %s132 = int_to_ptr.vmem [resolvable:$true] %s131
      %137 = dma.hbm_to_vmem [thread:$0]  %s15, 1024, %s132, [#allocation15], 64, 64, 4
    $region65: #{tpu_custom_call.1} parent=1 // pred_fallthru
      _
    // Predicated region
    $region66: #{tpu_custom_call.1} parent=1 // pred_check
      _
    $region67: #{tpu_custom_call.1} parent=1 // pred_check_branch
      %139 = sbr.rel (0) target = $region69
    $region68: #{tpu_custom_call.1} parent=1 // pred_region
      _
    $region69: #{tpu_custom_call.1} parent=1 // pred_fallthru
      _
    // Predicated region
    $region70: #{tpu_custom_call.1} parent=1 // pred_check
      _
    $region71: #{tpu_custom_call.1} parent=1 // pred_check_branch
      %141 = sbr.rel (0) target = $region73
    $region72: #{tpu_custom_call.1} parent=1 // pred_region
      %142 = dma.done [#allocation3], 256
    $region73: #{tpu_custom_call.1} parent=1 // pred_fallthru
      _
    // Predicated region
    $region74: #{tpu_custom_call.1} parent=1 // pred_check
      _
    $region75: #{tpu_custom_call.1} parent=1 // pred_check_branch
      %144 = sbr.rel (0) target = $region77
    $region76: #{tpu_custom_call.1} parent=1 // pred_region
      %145 = dma.done [#allocation6], 1024
    $region77: #{tpu_custom_call.1} parent=1 // pred_fallthru
      _
    // Predicated region
    $region78: #{tpu_custom_call.1} parent=1 // pred_check
      _
    $region79: #{tpu_custom_call.1} parent=1 // pred_check_branch
      %147 = sbr.rel (0) target = $region81
    $region80: #{tpu_custom_call.1} parent=1 // pred_region
      %148 = dma.done [#allocation6], 16
    $region81: #{tpu_custom_call.1} parent=1 // pred_fallthru
      _
    // Predicated region
    $region82: #{tpu_custom_call.1} parent=1 // pred_check
      _
    $region83: #{tpu_custom_call.1} parent=1 // pred_check_branch
      %150 = sbr.rel (0) target = $region85
    $region84: #{tpu_custom_call.1} parent=1 // pred_region
      %151 = dma.done [#allocation9], 3072
    $region85: #{tpu_custom_call.1} parent=1 // pred_fallthru
      _
    // Predicated region
    $region86: #{tpu_custom_call.1} parent=1 // pred_check
      _
    $region87: #{tpu_custom_call.1} parent=1 // pred_check_branch
      %153 = sbr.rel (0) target = $region89
    $region88: #{tpu_custom_call.1} parent=1 // pred_region
      %154 = dma.done [#allocation9], 1024
    $region89: #{tpu_custom_call.1} parent=1 // pred_fallthru
      _
    // Predicated region
    $region90: #{tpu_custom_call.1} parent=1 // pred_check
      _
    $region91: #{tpu_custom_call.1} parent=1 // pred_check_branch
      %156 = sbr.rel (0) target = $region93
    $region92: #{tpu_custom_call.1} parent=1 // pred_region
      %157 = dma.done [#allocation12], 4096
    $region93: #{tpu_custom_call.1} parent=1 // pred_fallthru
      _
    // Predicated region
    $region94: #{tpu_custom_call.1} parent=1 // pred_check
      _
    $region95: #{tpu_custom_call.1} parent=1 // pred_check_branch
      %159 = sbr.rel (0) target = $region97
    $region96: #{tpu_custom_call.1} parent=1 // pred_region
      %160 = dma.done [#allocation12], 4096
    $region97: #{tpu_custom_call.1} parent=1 // pred_fallthru
      _
    // Predicated region
    $region98: #{tpu_custom_call.1} parent=1 // pred_check
      _
    $region99: #{tpu_custom_call.1} parent=1 // pred_check_branch
      %162 = sbr.rel (0) target = $region101
    $region100: #{tpu_custom_call.1} parent=1 // pred_region
      %163 = dma.done [#allocation15], 1024
    $region101: #{tpu_custom_call.1} parent=1 // pred_fallthru
      _
    %v165 = vld [vmem:[#allocation2] sm:$0xff]
    %v166 = vld [vmem:[#allocation2 + $0x8] sm:$0xff]
    %v167 = vpack.c.bf16 %v166, %v165
    %v168 = vld [vmem:[#allocation5] sm:$0xf]
    %v169 = vld [vmem:[#allocation5 + $0x4] sm:$0xf]
    %v170 = vld [vmem:[#allocation5 + $0x8] sm:$0xf]
    %v171 = vld [vmem:[#allocation5 + $0xc] sm:$0xf]
    %v172 = vld [vmem:[#allocation5 + $0x10] sm:$0xf]
    %v173 = vld [vmem:[#allocation5 + $0x14] sm:$0xf]
    %v174 = vld [vmem:[#allocation5 + $0x18] sm:$0xf]
    %v175 = vld [vmem:[#allocation5 + $0x1c] sm:$0xf]
    %v176 = vld [vmem:[#allocation5 + $0x20] sm:$0xf]
    %v177 = vld [vmem:[#allocation5 + $0x24] sm:$0xf]
    %v178 = vld [vmem:[#allocation5 + $0x28] sm:$0xf]
    %v179 = vld [vmem:[#allocation5 + $0x2c] sm:$0xf]
    %v180 = vld [vmem:[#allocation5 + $0x30] sm:$0xf]
    %v181 = vld [vmem:[#allocation5 + $0x34] sm:$0xf]
    %v182 = vld [vmem:[#allocation5 + $0x38] sm:$0xf]
    %v183 = vld [vmem:[#allocation5 + $0x3c] sm:$0xf]
    %v184 = vld [vmem:[#allocation7] sm:$0x1]
    %v186 = vlaneseq
    %v187 = vshrl.u32 %v186, 7
    %v188 = vsub.s32 0, %v187
    %v189 = vrot.slane %v184, %v188
    %v207 = vunpack.c.l.b16 %v168
    %v208 = vunpack.c.l.b16 %v169
    %v209 = vunpack.c.l.b16 %v170
    %v210 = vunpack.c.l.b16 %v171
    %v211 = vunpack.c.l.b16 %v172
    %v212 = vunpack.c.l.b16 %v173
    %v213 = vunpack.c.l.b16 %v174
    %v214 = vunpack.c.l.b16 %v175
    %v215 = vunpack.c.l.b16 %v176
    %v216 = vunpack.c.l.b16 %v177
    %v217 = vunpack.c.l.b16 %v178
    %v218 = vunpack.c.l.b16 %v179
    %v219 = vunpack.c.l.b16 %v180
    %v220 = vunpack.c.l.b16 %v181
    %v221 = vunpack.c.l.b16 %v182
    %v222 = vunpack.c.l.b16 %v183
    %v223 = vpack.c.b16 %v208, %v207
    %v224 = vpack.c.b16 %v210, %v209
    %v225 = vpack.c.b16 %v212, %v211
    %v226 = vpack.c.b16 %v214, %v213
    %v227 = vpack.c.b16 %v216, %v215
    %v228 = vpack.c.b16 %v218, %v217
    %v229 = vpack.c.b16 %v220, %v219
    %v230 = vpack.c.b16 %v222, %v221
    %239 = vmatprep.subr.bf16.mxu0 0
    %240 = vmatpush1.bf16.msra.mxu0 %v223
    %241 = vmatprep.subr.bf16.mxu0 0
    %242 = vmatpush1.bf16.msra.mxu0 %v224
    %243 = vmatprep.subr.bf16.mxu0 0
    %244 = vmatpush1.bf16.msra.mxu0 %v225
    %245 = vmatprep.subr.bf16.mxu0 0
    %246 = vmatpush1.bf16.msra.mxu0 %v226
    %247 = vmatprep.subr.bf16.mxu0 0
    %248 = vmatpush1.bf16.msra.mxu0 %v227
    %249 = vmatprep.subr.bf16.mxu0 0
    %250 = vmatpush1.bf16.msra.mxu0 %v228
    %251 = vmatprep.subr.bf16.mxu0 0
    %252 = vmatpush1.bf16.msra.mxu0 %v229
    %253 = vmatprep.subr.bf16.mxu0 0
    %254 = vmatpush1.bf16.msra.mxu0 %v230
    %255 = vmatprep.subr.bf16.mxu0 0
    %256 = vmatpush1.bf16.msra.mxu0 0
    %257 = vmatprep.subr.bf16.mxu0 0
    %258 = vmatpush1.bf16.msra.mxu0 0
    %259 = vmatprep.subr.bf16.mxu0 0
    %260 = vmatpush1.bf16.msra.mxu0 0
    %261 = vmatprep.subr.bf16.mxu0 0
    %262 = vmatpush1.bf16.msra.mxu0 0
    %263 = vmatprep.subr.bf16.mxu0 0
    %264 = vmatpush1.bf16.msra.mxu0 0
    %265 = vmatprep.subr.bf16.mxu0 0
    %266 = vmatpush1.bf16.msra.mxu0 0
    %267 = vmatprep.subr.bf16.mxu0 0
    %268 = vmatpush1.bf16.msra.mxu0 0
    %269 = vmatprep.subr.bf16.mxu0 0
    %270 = vmatpush1.bf16.msra.mxu0 0
    %271 = vmatprep.mubr.bf16.mxu0 0
    %272 = vmatmul.mubr.bf16.gmra.mrb[0].mxu0 %v167
    %v273 = vpop.f32.mrb[0].mxu0
    %v274 = vadd.f32 %v189, %v273
    %v275 = vpop.f32.mrb[0].mxu0
    %v276 = vpop.f32.mrb[0].mxu0
    %v277 = vadd.f32 %v189, %v276
    %v278 = vpop.f32.mrb[0].mxu0
    %279 = vdwg.mxu0
    %v280 = vld [vmem:[%s7] sm:$0x1]
    %v281 = vld [vmem:[%s8] sm:$0x1]
    %282 = vadd.xlane.f32.xlu0 %v274
    %v283 = vpop.xlane.xlu0 %282
    %284 = vadd.xlane.f32.xlu0 %v277
    %v285 = vpop.xlane.xlu0 %284
    %v286 = vmul.f32 %v274, %v274
    %v287 = vmul.f32 %v277, %v277
    %288 = vadd.xlane.f32.xlu0 %v286
    %v289 = vpop.xlane.xlu0 %288
    %290 = vadd.xlane.f32.xlu0 %v287
    %v291 = vpop.xlane.xlu0 %290
    %v292 = vmul.f32 %v283, 0.0078125
    %v293 = vmul.f32 %v285, 0.0078125
    %v294 = vmul.f32 %v289, 0.0078125
    %v295 = vmul.f32 %v291, 0.0078125
    %v296 = vmul.f32 %v292, %v292
    %v297 = vmul.f32 %v293, %v293
    %v298 = vsub.f32 %v294, %v296
    %v299 = vsub.f32 %v295, %v297
    %v300 = vmax.f32 %v298, 0.0
    %v301 = vmax.f32 %v299, 0.0
    %v302 = vsub.f32 %v274, %v292
    %v303 = vsub.f32 %v277, %v293
    %v304 = vadd.f32 %v300, 1e-05
    %v305 = vadd.f32 %v301, 1e-05
    %v306 = vrsqrt.pop %v304
    %v307 = vrsqrt.pop %v305
    %v308 = vmul.f32 %v302, %v306
    %v309 = vmul.f32 %v303, %v307
    %v311 = vlaneseq
    %v312 = vshrl.u32 %v311, 7
    %v313 = vsub.s32 0, %v312
    %v314 = vrot.slane %v280, %v313
    %v316 = vmul.f32 %v308, %v314
    %v317 = vmul.f32 %v309, %v314
    %v319 = vlaneseq
    %v320 = vshrl.u32 %v319, 7
    %v321 = vsub.s32 0, %v320
    %v322 = vrot.slane %v281, %v321
    %v324 = vadd.f32 %v316, %v322
    %v325 = vadd.f32 %v317, %v322
    %v326 = vpack.c.bf16 %v325, %v324
    %v327 = vld [vmem:[#allocation8] sm:$0xff]
    %v328 = vld [vmem:[#allocation8 + $0x8] sm:$0xf]
    %v329 = vld [vmem:[#allocation8 + $0xc] sm:$0xff]
    %v330 = vld [vmem:[#allocation8 + $0x14] sm:$0xf]
    %v331 = vld [vmem:[#allocation8 + $0x18] sm:$0xff]
    %v332 = vld [vmem:[#allocation8 + $0x20] sm:$0xf]
    %v333 = vld [vmem:[#allocation8 + $0x24] sm:$0xff]
    %v334 = vld [vmem:[#allocation8 + $0x2c] sm:$0xf]
    %v335 = vld [vmem:[#allocation8 + $0x30] sm:$0xff]
    %v336 = vld [vmem:[#allocation8 + $0x38] sm:$0xf]
    %v337 = vld [vmem:[#allocation8 + $0x3c] sm:$0xff]
    %v338 = vld [vmem:[#allocation8 + $0x44] sm:$0xf]
    %v339 = vld [vmem:[#allocation8 + $0x48] sm:$0xff]
    %v340 = vld [vmem:[#allocation8 + $0x50] sm:$0xf]
    %v341 = vld [vmem:[#allocation8 + $0x54] sm:$0xff]
    %v342 = vld [vmem:[#allocation8 + $0x5c] sm:$0xf]
    %v343 = vld [vmem:[#allocation8 + $0x60] sm:$0xff]
    %v344 = vld [vmem:[#allocation8 + $0x68] sm:$0xf]
    %v345 = vld [vmem:[#allocation8 + $0x6c] sm:$0xff]
    %v346 = vld [vmem:[#allocation8 + $0x74] sm:$0xf]
    %v347 = vld [vmem:[#allocation8 + $0x78] sm:$0xff]
    %v348 = vld [vmem:[#allocation8 + $0x80] sm:$0xf]
    %v349 = vld [vmem:[#allocation8 + $0x84] sm:$0xff]
    %v350 = vld [vmem:[#allocation8 + $0x8c] sm:$0xf]
    %v351 = vld [vmem:[#allocation8 + $0x90] sm:$0xff]
    %v352 = vld [vmem:[#allocation8 + $0x98] sm:$0xf]
    %v353 = vld [vmem:[#allocation8 + $0x9c] sm:$0xff]
    %v354 = vld [vmem:[#allocation8 + $0xa4] sm:$0xf]
    %v355 = vld [vmem:[#allocation8 + $0xa8] sm:$0xff]
    %v356 = vld [vmem:[#allocation8 + $0xb0] sm:$0xf]
    %v357 = vld [vmem:[#allocation8 + $0xb4] sm:$0xff]
    %v358 = vld [vmem:[#allocation8 + $0xbc] sm:$0xf]
    %v359 = vld [vmem:[%s4] sm:$0x7]
    %v361 = vlaneseq
    %v362 = vshrl.u32 %v361, 7
    %v363 = vsub.s32 0, %v362
    %v364 = vrot.slane %v359, %v363
    %v365 = vlaneseq
    %v366 = vshrl.u32 %v365, 7
    %v367 = vsub.s32 1, %v366
    %v368 = vrot.slane %v359, %v367
    %v369 = vlaneseq
    %v370 = vshrl.u32 %v369, 7
    %v371 = vsub.s32 2, %v370
    %v372 = vrot.slane %v359, %v371
    %v408 = vunpack.c.l.b16 %v327
    %v409 = vunpack.c.h.b16 %v327
    %v410 = vunpack.c.l.b16 %v328
    %v411 = vunpack.c.l.b16 %v329
    %v412 = vunpack.c.h.b16 %v329
    %v413 = vunpack.c.l.b16 %v330
    %v414 = vunpack.c.l.b16 %v331
    %v415 = vunpack.c.h.b16 %v331
    %v416 = vunpack.c.l.b16 %v332
    %v417 = vunpack.c.l.b16 %v333
    %v418 = vunpack.c.h.b16 %v333
    %v419 = vunpack.c.l.b16 %v334
    %v420 = vunpack.c.l.b16 %v335
    %v421 = vunpack.c.h.b16 %v335
    %v422 = vunpack.c.l.b16 %v336
    %v423 = vunpack.c.l.b16 %v337
    %v424 = vunpack.c.h.b16 %v337
    %v425 = vunpack.c.l.b16 %v338
    %v426 = vunpack.c.l.b16 %v339
    %v427 = vunpack.c.h.b16 %v339
    %v428 = vunpack.c.l.b16 %v340
    %v429 = vunpack.c.l.b16 %v341
    %v430 = vunpack.c.h.b16 %v341
    %v431 = vunpack.c.l.b16 %v342
    %v432 = vunpack.c.l.b16 %v343
    %v433 = vunpack.c.h.b16 %v343
    %v434 = vunpack.c.l.b16 %v344
    %v435 = vunpack.c.l.b16 %v345
    %v436 = vunpack.c.h.b16 %v345
    %v437 = vunpack.c.l.b16 %v346
    %v438 = vunpack.c.l.b16 %v347
    %v439 = vunpack.c.h.b16 %v347
    %v440 = vunpack.c.l.b16 %v348
    %v441 = vunpack.c.l.b16 %v349
    %v442 = vunpack.c.h.b16 %v349
    %v443 = vunpack.c.l.b16 %v350
    %v444 = vunpack.c.l.b16 %v351
    %v445 = vunpack.c.h.b16 %v351
    %v446 = vunpack.c.l.b16 %v352
    %v447 = vunpack.c.l.b16 %v353
    %v448 = vunpack.c.h.b16 %v353
    %v449 = vunpack.c.l.b16 %v354
    %v450 = vunpack.c.l.b16 %v355
    %v451 = vunpack.c.h.b16 %v355
    %v452 = vunpack.c.l.b16 %v356
    %v453 = vunpack.c.l.b16 %v357
    %v454 = vunpack.c.h.b16 %v357
    %v455 = vunpack.c.l.b16 %v358
    %v456 = vpack.c.b16 %v411, %v408
    %v457 = vpack.c.b16 %v412, %v409
    %v458 = vpack.c.b16 %v413, %v410
    %v459 = vpack.c.b16 %v417, %v414
    %v460 = vpack.c.b16 %v418, %v415
    %v461 = vpack.c.b16 %v419, %v416
    %v462 = vpack.c.b16 %v423, %v420
    %v463 = vpack.c.b16 %v424, %v421
    %v464 = vpack.c.b16 %v425, %v422
    %v465 = vpack.c.b16 %v429, %v426
    %v466 = vpack.c.b16 %v430, %v427
    %v467 = vpack.c.b16 %v431, %v428
    %v468 = vpack.c.b16 %v435, %v432
    %v469 = vpack.c.b16 %v436, %v433
    %v470 = vpack.c.b16 %v437, %v434
    %v471 = vpack.c.b16 %v441, %v438
    %v472 = vpack.c.b16 %v442, %v439
    %v473 = vpack.c.b16 %v443, %v440
    %v474 = vpack.c.b16 %v447, %v444
    %v475 = vpack.c.b16 %v448, %v445
    %v476 = vpack.c.b16 %v449, %v446
    %v477 = vpack.c.b16 %v453, %v450
    %v478 = vpack.c.b16 %v454, %v451
    %v479 = vpack.c.b16 %v455, %v452
    %504 = vmatprep.subr.bf16.mxu0 %v457
    %505 = vmatpush1.bf16.msra.mxu0 %v456
    %506 = vmatprep.subr.bf16.mxu0 %v460
    %507 = vmatpush1.bf16.msra.mxu0 %v459
    %508 = vmatprep.subr.bf16.mxu0 %v463
    %509 = vmatpush1.bf16.msra.mxu0 %v462
    %510 = vmatprep.subr.bf16.mxu0 %v466
    %511 = vmatpush1.bf16.msra.mxu0 %v465
    %512 = vmatprep.subr.bf16.mxu0 %v469
    %513 = vmatpush1.bf16.msra.mxu0 %v468
    %514 = vmatprep.subr.bf16.mxu0 %v472
    %515 = vmatpush1.bf16.msra.mxu0 %v471
    %516 = vmatprep.subr.bf16.mxu0 %v475
    %517 = vmatpush1.bf16.msra.mxu0 %v474
    %518 = vmatprep.subr.bf16.mxu0 %v478
    %519 = vmatpush1.bf16.msra.mxu0 %v477
    %520 = vmatprep.subr.bf16.mxu0 0
    %521 = vmatpush1.bf16.msra.mxu0 0
    %522 = vmatprep.subr.bf16.mxu0 0
    %523 = vmatpush1.bf16.msra.mxu0 0
    %524 = vmatprep.subr.bf16.mxu0 0
    %525 = vmatpush1.bf16.msra.mxu0 0
    %526 = vmatprep.subr.bf16.mxu0 0
    %527 = vmatpush1.bf16.msra.mxu0 0
    %528 = vmatprep.subr.bf16.mxu0 0
    %529 = vmatpush1.bf16.msra.mxu0 0
    %530 = vmatprep.subr.bf16.mxu0 0
    %531 = vmatpush1.bf16.msra.mxu0 0
    %532 = vmatprep.subr.bf16.mxu0 0
    %533 = vmatpush1.bf16.msra.mxu0 0
    %534 = vmatprep.subr.bf16.mxu0 0
    %535 = vmatpush1.bf16.msra.mxu0 0
    %536 = vmatprep.mubr.bf16.mxu0 0
    %537 = vmatmul.mubr.bf16.gmra.mrb[0].mxu0 %v326
    %v538 = vpop.f32.mrb[0].mxu0
    %v539 = vadd.f32 %v364, %v538
    %v540 = vpop.f32.mrb[0].mxu0
    %v541 = vadd.f32 %v368, %v540
    %v542 = vpop.f32.mrb[0].mxu0
    %v543 = vadd.f32 %v364, %v542
    %v544 = vpop.f32.mrb[0].mxu0
    %v545 = vadd.f32 %v368, %v544
    %546 = vdwg.mxu0
    %547 = vmatprep.subr.bf16.mxu0 0
    %548 = vmatpush1.bf16.msra.mxu0 %v458
    %549 = vmatprep.subr.bf16.mxu0 0
    %550 = vmatpush1.bf16.msra.mxu0 %v461
    %551 = vmatprep.subr.bf16.mxu0 0
    %552 = vmatpush1.bf16.msra.mxu0 %v464
    %553 = vmatprep.subr.bf16.mxu0 0
    %554 = vmatpush1.bf16.msra.mxu0 %v467
    %555 = vmatprep.subr.bf16.mxu0 0
    %556 = vmatpush1.bf16.msra.mxu0 %v470
    %557 = vmatprep.subr.bf16.mxu0 0
    %558 = vmatpush1.bf16.msra.mxu0 %v473
    %559 = vmatprep.subr.bf16.mxu0 0
    %560 = vmatpush1.bf16.msra.mxu0 %v476
    %561 = vmatprep.subr.bf16.mxu0 0
    %562 = vmatpush1.bf16.msra.mxu0 %v479
    %563 = vmatprep.subr.bf16.mxu0 0
    %564 = vmatpush1.bf16.msra.mxu0 0
    %565 = vmatprep.subr.bf16.mxu0 0
    %566 = vmatpush1.bf16.msra.mxu0 0
    %567 = vmatprep.subr.bf16.mxu0 0
    %568 = vmatpush1.bf16.msra.mxu0 0
    %569 = vmatprep.subr.bf16.mxu0 0
    %570 = vmatpush1.bf16.msra.mxu0 0
    %571 = vmatprep.subr.bf16.mxu0 0
    %572 = vmatpush1.bf16.msra.mxu0 0
    %573 = vmatprep.subr.bf16.mxu0 0
    %574 = vmatpush1.bf16.msra.mxu0 0
    %575 = vmatprep.subr.bf16.mxu0 0
    %576 = vmatpush1.bf16.msra.mxu0 0
    %577 = vmatprep.subr.bf16.mxu0 0
    %578 = vmatpush1.bf16.msra.mxu0 0
    %579 = vmatprep.mubr.bf16.mxu0 0
    %580 = vmatmul.mubr.bf16.gmra.mrb[0].mxu0 %v326
    %v581 = vpop.f32.mrb[0].mxu0
    %v582 = vadd.f32 %v372, %v581
    %v583 = vpop.f32.mrb[0].mxu0
    %v584 = vpop.f32.mrb[0].mxu0
    %v585 = vadd.f32 %v372, %v584
    %v586 = vpop.f32.mrb[0].mxu0
    %587 = vdwg.mxu0
    %589 = vrot.lane.b32.xlu0 %v539, 96
    %v590 = vpop.permute.xlu0 %589
    %592 = vrot.lane.b32.xlu0 %v539, 64
    %v593 = vpop.permute.xlu0 %592
    %595 = vrot.lane.b32.xlu0 %v539, 32
    %v596 = vpop.permute.xlu0 %595
    %599 = vrot.lane.b32.xlu0 %v543, 96
    %v600 = vpop.permute.xlu0 %599
    %602 = vrot.lane.b32.xlu0 %v543, 64
    %v603 = vpop.permute.xlu0 %602
    %605 = vrot.lane.b32.xlu0 %v543, 32
    %v606 = vpop.permute.xlu0 %605
    %v608 = vpack.c.bf16 %v539, %v539
    %v609 = vpack.c.bf16 %v590, %v590
    %v610 = vpack.c.bf16 %v593, %v593
    %v611 = vpack.c.bf16 %v596, %v596
    %v612 = vpack.c.bf16 %v543, %v543
    %v613 = vpack.c.bf16 %v600, %v600
    %v614 = vpack.c.bf16 %v603, %v603
    %v615 = vpack.c.bf16 %v606, %v606
    %617 = vrot.lane.b32.xlu0 %v541, 96
    %v618 = vpop.permute.xlu0 %617
    %620 = vrot.lane.b32.xlu0 %v541, 64
    %v621 = vpop.permute.xlu0 %620
    %623 = vrot.lane.b32.xlu0 %v541, 32
    %v624 = vpop.permute.xlu0 %623
    %627 = vrot.lane.b32.xlu0 %v545, 96
    %v628 = vpop.permute.xlu0 %627
    %630 = vrot.lane.b32.xlu0 %v545, 64
    %v631 = vpop.permute.xlu0 %630
    %633 = vrot.lane.b32.xlu0 %v545, 32
    %v634 = vpop.permute.xlu0 %633
    %v636 = vpack.c.bf16 %v541, %v541
    %v637 = vpack.c.bf16 %v618, %v618
    %v638 = vpack.c.bf16 %v621, %v621
    %v639 = vpack.c.bf16 %v624, %v624
    %v640 = vpack.c.bf16 %v545, %v545
    %v641 = vpack.c.bf16 %v628, %v628
    %v642 = vpack.c.bf16 %v631, %v631
    %v643 = vpack.c.bf16 %v634, %v634
    %645 = vrot.lane.b32.xlu0 %v582, 96
    %v646 = vpop.permute.xlu0 %645
    %648 = vrot.lane.b32.xlu0 %v582, 64
    %v649 = vpop.permute.xlu0 %648
    %651 = vrot.lane.b32.xlu0 %v582, 32
    %v652 = vpop.permute.xlu0 %651
    %655 = vrot.lane.b32.xlu0 %v585, 96
    %v656 = vpop.permute.xlu0 %655
    %658 = vrot.lane.b32.xlu0 %v585, 64
    %v659 = vpop.permute.xlu0 %658
    %661 = vrot.lane.b32.xlu0 %v585, 32
    %v662 = vpop.permute.xlu0 %661
    %v664 = vpack.c.bf16 %v582, %v582
    %v665 = vpack.c.bf16 %v646, %v646
    %v666 = vpack.c.bf16 %v649, %v649
    %v667 = vpack.c.bf16 %v652, %v652
    %v668 = vpack.c.bf16 %v585, %v585
    %v669 = vpack.c.bf16 %v656, %v656
    %v670 = vpack.c.bf16 %v659, %v659
    %v671 = vpack.c.bf16 %v662, %v662
    %vm672 = vcmask 261120
    %v674 = vsel %vm672, %v608, 0
    %v677 = vsel %vm672, %v636, 0
    %679 = vmatprep.subr.bf16.mxu0 0
    %680 = vmatpush1.bf16.xpose.msra.mxu0 %v677
    %681 = vmatprep.subr.bf16.mxu0 0
    %682 = vmatpush1.bf16.xpose.msra.mxu0 0
    %683 = vmatprep.subr.bf16.mxu0 0
    %684 = vmatpush1.bf16.xpose.msra.mxu0 0
    %685 = vmatprep.subr.bf16.mxu0 0
    %686 = vmatpush1.bf16.xpose.msra.mxu0 0
    %687 = vmatprep.subr.bf16.mxu0 0
    %688 = vmatpush1.bf16.xpose.msra.mxu0 0
    %689 = vmatprep.subr.bf16.mxu0 0
    %690 = vmatpush1.bf16.xpose.msra.mxu0 0
    %691 = vmatprep.subr.bf16.mxu0 0
    %692 = vmatpush1.bf16.xpose.msra.mxu0 0
    %693 = vmatprep.subr.bf16.mxu0 0
    %694 = vmatpush1.bf16.xpose.msra.mxu0 0
    %695 = vmatprep.subr.bf16.mxu0 0
    %696 = vmatpush1.bf16.xpose.msra.mxu0 0
    %697 = vmatprep.subr.bf16.mxu0 0
    %698 = vmatpush1.bf16.xpose.msra.mxu0 0
    %699 = vmatprep.subr.bf16.mxu0 0
    %700 = vmatpush1.bf16.xpose.msra.mxu0 0
    %701 = vmatprep.subr.bf16.mxu0 0
    %702 = vmatpush1.bf16.xpose.msra.mxu0 0
    %703 = vmatprep.subr.bf16.mxu0 0
    %704 = vmatpush1.bf16.xpose.msra.mxu0 0
    %705 = vmatprep.subr.bf16.mxu0 0
    %706 = vmatpush1.bf16.xpose.msra.mxu0 0
    %707 = vmatprep.subr.bf16.mxu0 0
    %708 = vmatpush1.bf16.xpose.msra.mxu0 0
    %709 = vmatprep.subr.bf16.mxu0 0
    %710 = vmatpush1.bf16.xpose.msra.mxu0 0
    %711 = vmatprep.mubr.bf16.mxu0 0
    %712 = vmatmul.mubr.bf16.gmra.mrb[0].mxu0 %v674
    %v713 = vpop.f32.mrb[0].mxu0
    %v714 = vadd.f32 0.0, %v713
    %v715 = vpop.f32.mrb[0].mxu0
    %v716 = vpop.f32.mrb[0].mxu0
    %v717 = vpop.f32.mrb[0].mxu0
    %718 = vdwg.mxu0
    %v720 = vsel %vm672, %v609, 0
    %v723 = vsel %vm672, %v637, 0
    %725 = vmatprep.subr.bf16.mxu0 0
    %726 = vmatpush1.bf16.xpose.msra.mxu0 %v723
    %727 = vmatprep.subr.bf16.mxu0 0
    %728 = vmatpush1.bf16.xpose.msra.mxu0 0
    %729 = vmatprep.subr.bf16.mxu0 0
    %730 = vmatpush1.bf16.xpose.msra.mxu0 0
    %731 = vmatprep.subr.bf16.mxu0 0
    %732 = vmatpush1.bf16.xpose.msra.mxu0 0
    %733 = vmatprep.subr.bf16.mxu0 0
    %734 = vmatpush1.bf16.xpose.msra.mxu0 0
    %735 = vmatprep.subr.bf16.mxu0 0
    %736 = vmatpush1.bf16.xpose.msra.mxu0 0
    %737 = vmatprep.subr.bf16.mxu0 0
    %738 = vmatpush1.bf16.xpose.msra.mxu0 0
    %739 = vmatprep.subr.bf16.mxu0 0
    %740 = vmatpush1.bf16.xpose.msra.mxu0 0
    %741 = vmatprep.subr.bf16.mxu0 0
    %742 = vmatpush1.bf16.xpose.msra.mxu0 0
    %743 = vmatprep.subr.bf16.mxu0 0
    %744 = vmatpush1.bf16.xpose.msra.mxu0 0
    %745 = vmatprep.subr.bf16.mxu0 0
    %746 = vmatpush1.bf16.xpose.msra.mxu0 0
    %747 = vmatprep.subr.bf16.mxu0 0
    %748 = vmatpush1.bf16.xpose.msra.mxu0 0
    %749 = vmatprep.subr.bf16.mxu0 0
    %750 = vmatpush1.bf16.xpose.msra.mxu0 0
    %751 = vmatprep.subr.bf16.mxu0 0
    %752 = vmatpush1.bf16.xpose.msra.mxu0 0
    %753 = vmatprep.subr.bf16.mxu0 0
    %754 = vmatpush1.bf16.xpose.msra.mxu0 0
    %755 = vmatprep.subr.bf16.mxu0 0
    %756 = vmatpush1.bf16.xpose.msra.mxu0 0
    %757 = vmatprep.mubr.bf16.mxu0 0
    %758 = vmatmul.mubr.bf16.gmra.mrb[0].mxu0 %v720
    %v759 = vpop.f32.mrb[0].mxu0
    %v760 = vadd.f32 0.0, %v759
    %v761 = vpop.f32.mrb[0].mxu0
    %v762 = vpop.f32.mrb[0].mxu0
    %v763 = vpop.f32.mrb[0].mxu0
    %764 = vdwg.mxu0
    %v766 = vsel %vm672, %v610, 0
    %v769 = vsel %vm672, %v638, 0
    %771 = vmatprep.subr.bf16.mxu0 0
    %772 = vmatpush1.bf16.xpose.msra.mxu0 %v769
    %773 = vmatprep.subr.bf16.mxu0 0
    %774 = vmatpush1.bf16.xpose.msra.mxu0 0
    %775 = vmatprep.subr.bf16.mxu0 0
    %776 = vmatpush1.bf16.xpose.msra.mxu0 0
    %777 = vmatprep.subr.bf16.mxu0 0
    %778 = vmatpush1.bf16.xpose.msra.mxu0 0
    %779 = vmatprep.subr.bf16.mxu0 0
    %780 = vmatpush1.bf16.xpose.msra.mxu0 0
    %781 = vmatprep.subr.bf16.mxu0 0
    %782 = vmatpush1.bf16.xpose.msra.mxu0 0
    %783 = vmatprep.subr.bf16.mxu0 0
    %784 = vmatpush1.bf16.xpose.msra.mxu0 0
    %785 = vmatprep.subr.bf16.mxu0 0
    %786 = vmatpush1.bf16.xpose.msra.mxu0 0
    %787 = vmatprep.subr.bf16.mxu0 0
    %788 = vmatpush1.bf16.xpose.msra.mxu0 0
    %789 = vmatprep.subr.bf16.mxu0 0
    %790 = vmatpush1.bf16.xpose.msra.mxu0 0
    %791 = vmatprep.subr.bf16.mxu0 0
    %792 = vmatpush1.bf16.xpose.msra.mxu0 0
    %793 = vmatprep.subr.bf16.mxu0 0
    %794 = vmatpush1.bf16.xpose.msra.mxu0 0
    %795 = vmatprep.subr.bf16.mxu0 0
    %796 = vmatpush1.bf16.xpose.msra.mxu0 0
    %797 = vmatprep.subr.bf16.mxu0 0
    %798 = vmatpush1.bf16.xpose.msra.mxu0 0
    %799 = vmatprep.subr.bf16.mxu0 0
    %800 = vmatpush1.bf16.xpose.msra.mxu0 0
    %801 = vmatprep.subr.bf16.mxu0 0
    %802 = vmatpush1.bf16.xpose.msra.mxu0 0
    %803 = vmatprep.mubr.bf16.mxu0 0
    %804 = vmatmul.mubr.bf16.gmra.mrb[0].mxu0 %v766
    %v805 = vpop.f32.mrb[0].mxu0
    %v806 = vadd.f32 0.0, %v805
    %v807 = vpop.f32.mrb[0].mxu0
    %v808 = vpop.f32.mrb[0].mxu0
    %v809 = vpop.f32.mrb[0].mxu0
    %810 = vdwg.mxu0
    %v812 = vsel %vm672, %v611, 0
    %v815 = vsel %vm672, %v639, 0
    %817 = vmatprep.subr.bf16.mxu0 0
    %818 = vmatpush1.bf16.xpose.msra.mxu0 %v815
    %819 = vmatprep.subr.bf16.mxu0 0
    %820 = vmatpush1.bf16.xpose.msra.mxu0 0
    %821 = vmatprep.subr.bf16.mxu0 0
    %822 = vmatpush1.bf16.xpose.msra.mxu0 0
    %823 = vmatprep.subr.bf16.mxu0 0
    %824 = vmatpush1.bf16.xpose.msra.mxu0 0
    %825 = vmatprep.subr.bf16.mxu0 0
    %826 = vmatpush1.bf16.xpose.msra.mxu0 0
    %827 = vmatprep.subr.bf16.mxu0 0
    %828 = vmatpush1.bf16.xpose.msra.mxu0 0
    %829 = vmatprep.subr.bf16.mxu0 0
    %830 = vmatpush1.bf16.xpose.msra.mxu0 0
    %831 = vmatprep.subr.bf16.mxu0 0
    %832 = vmatpush1.bf16.xpose.msra.mxu0 0
    %833 = vmatprep.subr.bf16.mxu0 0
    %834 = vmatpush1.bf16.xpose.msra.mxu0 0
    %835 = vmatprep.subr.bf16.mxu0 0
    %836 = vmatpush1.bf16.xpose.msra.mxu0 0
    %837 = vmatprep.subr.bf16.mxu0 0
    %838 = vmatpush1.bf16.xpose.msra.mxu0 0
    %839 = vmatprep.subr.bf16.mxu0 0
    %840 = vmatpush1.bf16.xpose.msra.mxu0 0
    %841 = vmatprep.subr.bf16.mxu0 0
    %842 = vmatpush1.bf16.xpose.msra.mxu0 0
    %843 = vmatprep.subr.bf16.mxu0 0
    %844 = vmatpush1.bf16.xpose.msra.mxu0 0
    %845 = vmatprep.subr.bf16.mxu0 0
    %846 = vmatpush1.bf16.xpose.msra.mxu0 0
    %847 = vmatprep.subr.bf16.mxu0 0
    %848 = vmatpush1.bf16.xpose.msra.mxu0 0
    %849 = vmatprep.mubr.bf16.mxu0 0
    %850 = vmatmul.mubr.bf16.gmra.mrb[0].mxu0 %v812
    %v851 = vpop.f32.mrb[0].mxu0
    %v852 = vadd.f32 0.0, %v851
    %v853 = vpop.f32.mrb[0].mxu0
    %v854 = vpop.f32.mrb[0].mxu0
    %v855 = vpop.f32.mrb[0].mxu0
    %856 = vdwg.mxu0
    %v858 = vsel %vm672, %v612, 0
    %v861 = vsel %vm672, %v640, 0
    %863 = vmatprep.subr.bf16.mxu0 0
    %864 = vmatpush1.bf16.xpose.msra.mxu0 %v861
    %865 = vmatprep.subr.bf16.mxu0 0
    %866 = vmatpush1.bf16.xpose.msra.mxu0 0
    %867 = vmatprep.subr.bf16.mxu0 0
    %868 = vmatpush1.bf16.xpose.msra.mxu0 0
    %869 = vmatprep.subr.bf16.mxu0 0
    %870 = vmatpush1.bf16.xpose.msra.mxu0 0
    %871 = vmatprep.subr.bf16.mxu0 0
    %872 = vmatpush1.bf16.xpose.msra.mxu0 0
    %873 = vmatprep.subr.bf16.mxu0 0
    %874 = vmatpush1.bf16.xpose.msra.mxu0 0
    %875 = vmatprep.subr.bf16.mxu0 0
    %876 = vmatpush1.bf16.xpose.msra.mxu0 0
    %877 = vmatprep.subr.bf16.mxu0 0
    %878 = vmatpush1.bf16.xpose.msra.mxu0 0
    %879 = vmatprep.subr.bf16.mxu0 0
    %880 = vmatpush1.bf16.xpose.msra.mxu0 0
    %881 = vmatprep.subr.bf16.mxu0 0
    %882 = vmatpush1.bf16.xpose.msra.mxu0 0
    %883 = vmatprep.subr.bf16.mxu0 0
    %884 = vmatpush1.bf16.xpose.msra.mxu0 0
    %885 = vmatprep.subr.bf16.mxu0 0
    %886 = vmatpush1.bf16.xpose.msra.mxu0 0
    %887 = vmatprep.subr.bf16.mxu0 0
    %888 = vmatpush1.bf16.xpose.msra.mxu0 0
    %889 = vmatprep.subr.bf16.mxu0 0
    %890 = vmatpush1.bf16.xpose.msra.mxu0 0
    %891 = vmatprep.subr.bf16.mxu0 0
    %892 = vmatpush1.bf16.xpose.msra.mxu0 0
    %893 = vmatprep.subr.bf16.mxu0 0
    %894 = vmatpush1.bf16.xpose.msra.mxu0 0
    %895 = vmatprep.mubr.bf16.mxu0 0
    %896 = vmatmul.mubr.bf16.gmra.mrb[0].mxu0 %v858
    %v897 = vpop.f32.mrb[0].mxu0
    %v898 = vadd.f32 0.0, %v897
    %v899 = vpop.f32.mrb[0].mxu0
    %v900 = vpop.f32.mrb[0].mxu0
    %v901 = vpop.f32.mrb[0].mxu0
    %902 = vdwg.mxu0
    %v904 = vsel %vm672, %v613, 0
    %v907 = vsel %vm672, %v641, 0
    %909 = vmatprep.subr.bf16.mxu0 0
    %910 = vmatpush1.bf16.xpose.msra.mxu0 %v907
    %911 = vmatprep.subr.bf16.mxu0 0
    %912 = vmatpush1.bf16.xpose.msra.mxu0 0
    %913 = vmatprep.subr.bf16.mxu0 0
    %914 = vmatpush1.bf16.xpose.msra.mxu0 0
    %915 = vmatprep.subr.bf16.mxu0 0
    %916 = vmatpush1.bf16.xpose.msra.mxu0 0
    %917 = vmatprep.subr.bf16.mxu0 0
    %918 = vmatpush1.bf16.xpose.msra.mxu0 0
    %919 = vmatprep.subr.bf16.mxu0 0
    %920 = vmatpush1.bf16.xpose.msra.mxu0 0
    %921 = vmatprep.subr.bf16.mxu0 0
    %922 = vmatpush1.bf16.xpose.msra.mxu0 0
    %923 = vmatprep.subr.bf16.mxu0 0
    %924 = vmatpush1.bf16.xpose.msra.mxu0 0
    %925 = vmatprep.subr.bf16.mxu0 0
    %926 = vmatpush1.bf16.xpose.msra.mxu0 0
    %927 = vmatprep.subr.bf16.mxu0 0
    %928 = vmatpush1.bf16.xpose.msra.mxu0 0
    %929 = vmatprep.subr.bf16.mxu0 0
    %930 = vmatpush1.bf16.xpose.msra.mxu0 0
    %931 = vmatprep.subr.bf16.mxu0 0
    %932 = vmatpush1.bf16.xpose.msra.mxu0 0
    %933 = vmatprep.subr.bf16.mxu0 0
    %934 = vmatpush1.bf16.xpose.msra.mxu0 0
    %935 = vmatprep.subr.bf16.mxu0 0
    %936 = vmatpush1.bf16.xpose.msra.mxu0 0
    %937 = vmatprep.subr.bf16.mxu0 0
    %938 = vmatpush1.bf16.xpose.msra.mxu0 0
    %939 = vmatprep.subr.bf16.mxu0 0
    %940 = vmatpush1.bf16.xpose.msra.mxu0 0
    %941 = vmatprep.mubr.bf16.mxu0 0
    %942 = vmatmul.mubr.bf16.gmra.mrb[0].mxu0 %v904
    %v943 = vpop.f32.mrb[0].mxu0
    %v944 = vadd.f32 0.0, %v943
    %v945 = vpop.f32.mrb[0].mxu0
    %v946 = vpop.f32.mrb[0].mxu0
    %v947 = vpop.f32.mrb[0].mxu0
    %948 = vdwg.mxu0
    %v950 = vsel %vm672, %v614, 0
    %v953 = vsel %vm672, %v642, 0
    %955 = vmatprep.subr.bf16.mxu0 0
    %956 = vmatpush1.bf16.xpose.msra.mxu0 %v953
    %957 = vmatprep.subr.bf16.mxu0 0
    %958 = vmatpush1.bf16.xpose.msra.mxu0 0
    %959 = vmatprep.subr.bf16.mxu0 0
    %960 = vmatpush1.bf16.xpose.msra.mxu0 0
    %961 = vmatprep.subr.bf16.mxu0 0
    %962 = vmatpush1.bf16.xpose.msra.mxu0 0
    %963 = vmatprep.subr.bf16.mxu0 0
    %964 = vmatpush1.bf16.xpose.msra.mxu0 0
    %965 = vmatprep.subr.bf16.mxu0 0
    %966 = vmatpush1.bf16.xpose.msra.mxu0 0
    %967 = vmatprep.subr.bf16.mxu0 0
    %968 = vmatpush1.bf16.xpose.msra.mxu0 0
    %969 = vmatprep.subr.bf16.mxu0 0
    %970 = vmatpush1.bf16.xpose.msra.mxu0 0
    %971 = vmatprep.subr.bf16.mxu0 0
    %972 = vmatpush1.bf16.xpose.msra.mxu0 0
    %973 = vmatprep.subr.bf16.mxu0 0
    %974 = vmatpush1.bf16.xpose.msra.mxu0 0
    %975 = vmatprep.subr.bf16.mxu0 0
    %976 = vmatpush1.bf16.xpose.msra.mxu0 0
    %977 = vmatprep.subr.bf16.mxu0 0
    %978 = vmatpush1.bf16.xpose.msra.mxu0 0
    %979 = vmatprep.subr.bf16.mxu0 0
    %980 = vmatpush1.bf16.xpose.msra.mxu0 0
    %981 = vmatprep.subr.bf16.mxu0 0
    %982 = vmatpush1.bf16.xpose.msra.mxu0 0
    %983 = vmatprep.subr.bf16.mxu0 0
    %984 = vmatpush1.bf16.xpose.msra.mxu0 0
    %985 = vmatprep.subr.bf16.mxu0 0
    %986 = vmatpush1.bf16.xpose.msra.mxu0 0
    %987 = vmatprep.mubr.bf16.mxu0 0
    %988 = vmatmul.mubr.bf16.gmra.mrb[0].mxu0 %v950
    %v989 = vpop.f32.mrb[0].mxu0
    %v990 = vadd.f32 0.0, %v989
    %v991 = vpop.f32.mrb[0].mxu0
    %v992 = vpop.f32.mrb[0].mxu0
    %v993 = vpop.f32.mrb[0].mxu0
    %994 = vdwg.mxu0
    %v996 = vsel %vm672, %v615, 0
    %v999 = vsel %vm672, %v643, 0
    %1001 = vmatprep.subr.bf16.mxu0 0
    %1002 = vmatpush1.bf16.xpose.msra.mxu0 %v999
    %1003 = vmatprep.subr.bf16.mxu0 0
    %1004 = vmatpush1.bf16.xpose.msra.mxu0 0
    %1005 = vmatprep.subr.bf16.mxu0 0
    %1006 = vmatpush1.bf16.xpose.msra.mxu0 0
    %1007 = vmatprep.subr.bf16.mxu0 0
    %1008 = vmatpush1.bf16.xpose.msra.mxu0 0
    %1009 = vmatprep.subr.bf16.mxu0 0
    %1010 = vmatpush1.bf16.xpose.msra.mxu0 0
    %1011 = vmatprep.subr.bf16.mxu0 0
    %1012 = vmatpush1.bf16.xpose.msra.mxu0 0
    %1013 = vmatprep.subr.bf16.mxu0 0
    %1014 = vmatpush1.bf16.xpose.msra.mxu0 0
    %1015 = vmatprep.subr.bf16.mxu0 0
    %1016 = vmatpush1.bf16.xpose.msra.mxu0 0
    %1017 = vmatprep.subr.bf16.mxu0 0
    %1018 = vmatpush1.bf16.xpose.msra.mxu0 0
    %1019 = vmatprep.subr.bf16.mxu0 0
    %1020 = vmatpush1.bf16.xpose.msra.mxu0 0
    %1021 = vmatprep.subr.bf16.mxu0 0
    %1022 = vmatpush1.bf16.xpose.msra.mxu0 0
    %1023 = vmatprep.subr.bf16.mxu0 0
    %1024 = vmatpush1.bf16.xpose.msra.mxu0 0
    %1025 = vmatprep.subr.bf16.mxu0 0
    %1026 = vmatpush1.bf16.xpose.msra.mxu0 0
    %1027 = vmatprep.subr.bf16.mxu0 0
    %1028 = vmatpush1.bf16.xpose.msra.mxu0 0
    %1029 = vmatprep.subr.bf16.mxu0 0
    %1030 = vmatpush1.bf16.xpose.msra.mxu0 0
    %1031 = vmatprep.subr.bf16.mxu0 0
    %1032 = vmatpush1.bf16.xpose.msra.mxu0 0
    %1033 = vmatprep.mubr.bf16.mxu0 0
    %1034 = vmatmul.mubr.bf16.gmra.mrb[0].mxu0 %v996
    %v1035 = vpop.f32.mrb[0].mxu0
    %v1036 = vadd.f32 0.0, %v1035
    %v1037 = vpop.f32.mrb[0].mxu0
    %v1038 = vpop.f32.mrb[0].mxu0
    %v1039 = vpop.f32.mrb[0].mxu0
    %1040 = vdwg.mxu0
    %vm1041 = vcmask 64512
    %v1042 = vsel %vm1041, %v714, -inf
    %1043 = vmax.xlane.f32.xlu0 %v1042
    %v1044 = vpop.xlane.xlu0 %1043
    %v1045 = vsel %vm1041, %v760, -inf
    %1046 = vmax.xlane.f32.xlu0 %v1045
    %v1047 = vpop.xlane.xlu0 %1046
    %v1048 = vsel %vm1041, %v806, -inf
    %1049 = vmax.xlane.f32.xlu0 %v1048
    %v1050 = vpop.xlane.xlu0 %1049
    %v1051 = vsel %vm1041, %v852, -inf
    %1052 = vmax.xlane.f32.xlu0 %v1051
    %v1053 = vpop.xlane.xlu0 %1052
    %v1054 = vsel %vm1041, %v898, -inf
    %1055 = vmax.xlane.f32.xlu0 %v1054
    %v1056 = vpop.xlane.xlu0 %1055
    %v1057 = vsel %vm1041, %v944, -inf
    %1058 = vmax.xlane.f32.xlu0 %v1057
    %v1059 = vpop.xlane.xlu0 %1058
    %v1060 = vsel %vm1041, %v990, -inf
    %1061 = vmax.xlane.f32.xlu0 %v1060
    %v1062 = vpop.xlane.xlu0 %1061
    %v1063 = vsel %vm1041, %v1036, -inf
    %1064 = vmax.xlane.f32.xlu0 %v1063
    %v1065 = vpop.xlane.xlu0 %1064
    %v1066 = vsub.f32 %v714, %v1044
    %v1067 = vsub.f32 %v760, %v1047
    %v1068 = vsub.f32 %v806, %v1050
    %v1069 = vsub.f32 %v852, %v1053
    %v1070 = vsub.f32 %v898, %v1056
    %v1071 = vsub.f32 %v944, %v1059
    %v1072 = vsub.f32 %v990, %v1062
    %v1073 = vsub.f32 %v1036, %v1065
    %v1074 = vmul.f32 %v1066, 1.442695
    %v1075 = vpow.pop %v1074
    %v1076 = vmul.f32 %v1067, 1.442695
    %v1077 = vpow.pop %v1076
    %v1078 = vmul.f32 %v1068, 1.442695
    %v1079 = vpow.pop %v1078
    %v1080 = vmul.f32 %v1069, 1.442695
    %v1081 = vpow.pop %v1080
    %v1082 = vmul.f32 %v1070, 1.442695
    %v1083 = vpow.pop %v1082
    %v1084 = vmul.f32 %v1071, 1.442695
    %v1085 = vpow.pop %v1084
    %v1086 = vmul.f32 %v1072, 1.442695
    %v1087 = vpow.pop %v1086
    %v1088 = vmul.f32 %v1073, 1.442695
    %v1089 = vpow.pop %v1088
    %v1090 = vsel %vm1041, %v1075, 0.0
    %1091 = vadd.xlane.f32.xlu0 %v1090
    %v1092 = vpop.xlane.xlu0 %1091
    %v1093 = vsel %vm1041, %v1077, 0.0
    %1094 = vadd.xlane.f32.xlu0 %v1093
    %v1095 = vpop.xlane.xlu0 %1094
    %v1096 = vsel %vm1041, %v1079, 0.0
    %1097 = vadd.xlane.f32.xlu0 %v1096
    %v1098 = vpop.xlane.xlu0 %1097
    %v1099 = vsel %vm1041, %v1081, 0.0
    %1100 = vadd.xlane.f32.xlu0 %v1099
    %v1101 = vpop.xlane.xlu0 %1100
    %v1102 = vsel %vm1041, %v1083, 0.0
    %1103 = vadd.xlane.f32.xlu0 %v1102
    %v1104 = vpop.xlane.xlu0 %1103
    %v1105 = vsel %vm1041, %v1085, 0.0
    %1106 = vadd.xlane.f32.xlu0 %v1105
    %v1107 = vpop.xlane.xlu0 %1106
    %v1108 = vsel %vm1041, %v1087, 0.0
    %1109 = vadd.xlane.f32.xlu0 %v1108
    %v1110 = vpop.xlane.xlu0 %1109
    %v1111 = vsel %vm1041, %v1089, 0.0
    %1112 = vadd.xlane.f32.xlu0 %v1111
    %v1113 = vpop.xlane.xlu0 %1112
    %v1114 = vrcp.pop %v1092
    %v1115 = vrcp.pop %v1095
    %v1116 = vrcp.pop %v1098
    %v1117 = vrcp.pop %v1101
    %v1118 = vrcp.pop %v1104
    %v1119 = vrcp.pop %v1107
    %v1120 = vrcp.pop %v1110
    %v1121 = vrcp.pop %v1113
    %v1122 = vmul.f32 %v1075, %v1114
    %v1123 = vmul.f32 %v1077, %v1115
    %v1124 = vmul.f32 %v1079, %v1116
    %v1125 = vmul.f32 %v1081, %v1117
    %v1126 = vmul.f32 %v1083, %v1118
    %v1127 = vmul.f32 %v1085, %v1119
    %v1128 = vmul.f32 %v1087, %v1120
    %v1129 = vmul.f32 %v1089, %v1121
    %v1130 = vpack.c.bf16 %v1122, %v1122
    %v1131 = vpack.c.bf16 %v1123, %v1123
    %v1132 = vpack.c.bf16 %v1124, %v1124
    %v1133 = vpack.c.bf16 %v1125, %v1125
    %v1134 = vpack.c.bf16 %v1126, %v1126
    %v1135 = vpack.c.bf16 %v1127, %v1127
    %v1136 = vpack.c.bf16 %v1128, %v1128
    %v1137 = vpack.c.bf16 %v1129, %v1129
    %v1139 = vsel %vm1041, %v1130, 0
    %vm1141 = vcmask 1043456
    %v1143 = vsel %vm1141, %v664, 0
    %1145 = vmatprep.subr.bf16.mxu0 0
    %1146 = vmatpush1.bf16.msra.mxu0 %v1143
    %1147 = vmatprep.subr.bf16.mxu0 0
    %1148 = vmatpush1.bf16.msra.mxu0 0
    %1149 = vmatprep.subr.bf16.mxu0 0
    %1150 = vmatpush1.bf16.msra.mxu0 0
    %1151 = vmatprep.subr.bf16.mxu0 0
    %1152 = vmatpush1.bf16.msra.mxu0 0
    %1153 = vmatprep.subr.bf16.mxu0 0
    %1154 = vmatpush1.bf16.msra.mxu0 0
    %1155 = vmatprep.subr.bf16.mxu0 0
    %1156 = vmatpush1.bf16.msra.mxu0 0
    %1157 = vmatprep.subr.bf16.mxu0 0
    %1158 = vmatpush1.bf16.msra.mxu0 0
    %1159 = vmatprep.subr.bf16.mxu0 0
    %1160 = vmatpush1.bf16.msra.mxu0 0
    %1161 = vmatprep.subr.bf16.mxu0 0
    %1162 = vmatpush1.bf16.msra.mxu0 0
    %1163 = vmatprep.subr.bf16.mxu0 0
    %1164 = vmatpush1.bf16.msra.mxu0 0
    %1165 = vmatprep.subr.bf16.mxu0 0
    %1166 = vmatpush1.bf16.msra.mxu0 0
    %1167 = vmatprep.subr.bf16.mxu0 0
    %1168 = vmatpush1.bf16.msra.mxu0 0
    %1169 = vmatprep.subr.bf16.mxu0 0
    %1170 = vmatpush1.bf16.msra.mxu0 0
    %1171 = vmatprep.subr.bf16.mxu0 0
    %1172 = vmatpush1.bf16.msra.mxu0 0
    %1173 = vmatprep.subr.bf16.mxu0 0
    %1174 = vmatpush1.bf16.msra.mxu0 0
    %1175 = vmatprep.subr.bf16.mxu0 0
    %1176 = vmatpush1.bf16.msra.mxu0 0
    %1177 = vmatprep.mubr.bf16.mxu0 0
    %1178 = vmatmul.mubr.bf16.gmra.mrb[0].mxu0 %v1139
    %v1179 = vpop.f32.mrb[0].mxu0
    %v1180 = vadd.f32 0.0, %v1179
    %v1181 = vpop.f32.mrb[0].mxu0
    %v1182 = vpop.f32.mrb[0].mxu0
    %v1183 = vpop.f32.mrb[0].mxu0
    %1184 = vdwg.mxu0
    %v1186 = vsel %vm1041, %v1131, 0
    %v1189 = vsel %vm1141, %v665, 0
    %1191 = vmatprep.subr.bf16.mxu0 0
    %1192 = vmatpush1.bf16.msra.mxu0 %v1189
    %1193 = vmatprep.subr.bf16.mxu0 0
    %1194 = vmatpush1.bf16.msra.mxu0 0
    %1195 = vmatprep.subr.bf16.mxu0 0
    %1196 = vmatpush1.bf16.msra.mxu0 0
    %1197 = vmatprep.subr.bf16.mxu0 0
    %1198 = vmatpush1.bf16.msra.mxu0 0
    %1199 = vmatprep.subr.bf16.mxu0 0
    %1200 = vmatpush1.bf16.msra.mxu0 0
    %1201 = vmatprep.subr.bf16.mxu0 0
    %1202 = vmatpush1.bf16.msra.mxu0 0
    %1203 = vmatprep.subr.bf16.mxu0 0
    %1204 = vmatpush1.bf16.msra.mxu0 0
    %1205 = vmatprep.subr.bf16.mxu0 0
    %1206 = vmatpush1.bf16.msra.mxu0 0
    %1207 = vmatprep.subr.bf16.mxu0 0
    %1208 = vmatpush1.bf16.msra.mxu0 0
    %1209 = vmatprep.subr.bf16.mxu0 0
    %1210 = vmatpush1.bf16.msra.mxu0 0
    %1211 = vmatprep.subr.bf16.mxu0 0
    %1212 = vmatpush1.bf16.msra.mxu0 0
    %1213 = vmatprep.subr.bf16.mxu0 0
    %1214 = vmatpush1.bf16.msra.mxu0 0
    %1215 = vmatprep.subr.bf16.mxu0 0
    %1216 = vmatpush1.bf16.msra.mxu0 0
    %1217 = vmatprep.subr.bf16.mxu0 0
    %1218 = vmatpush1.bf16.msra.mxu0 0
    %1219 = vmatprep.subr.bf16.mxu0 0
    %1220 = vmatpush1.bf16.msra.mxu0 0
    %1221 = vmatprep.subr.bf16.mxu0 0
    %1222 = vmatpush1.bf16.msra.mxu0 0
    %1223 = vmatprep.mubr.bf16.mxu0 0
    %1224 = vmatmul.mubr.bf16.gmra.mrb[0].mxu0 %v1186
    %v1225 = vpop.f32.mrb[0].mxu0
    %v1226 = vadd.f32 0.0, %v1225
    %v1227 = vpop.f32.mrb[0].mxu0
    %v1228 = vpop.f32.mrb[0].mxu0
    %v1229 = vpop.f32.mrb[0].mxu0
    %1230 = vdwg.mxu0
    %v1232 = vsel %vm1041, %v1132, 0
    %v1235 = vsel %vm1141, %v666, 0
    %1237 = vmatprep.subr.bf16.mxu0 0
    %1238 = vmatpush1.bf16.msra.mxu0 %v1235
    %1239 = vmatprep.subr.bf16.mxu0 0
    %1240 = vmatpush1.bf16.msra.mxu0 0
    %1241 = vmatprep.subr.bf16.mxu0 0
    %1242 = vmatpush1.bf16.msra.mxu0 0
    %1243 = vmatprep.subr.bf16.mxu0 0
    %1244 = vmatpush1.bf16.msra.mxu0 0
    %1245 = vmatprep.subr.bf16.mxu0 0
    %1246 = vmatpush1.bf16.msra.mxu0 0
    %1247 = vmatprep.subr.bf16.mxu0 0
    %1248 = vmatpush1.bf16.msra.mxu0 0
    %1249 = vmatprep.subr.bf16.mxu0 0
    %1250 = vmatpush1.bf16.msra.mxu0 0
    %1251 = vmatprep.subr.bf16.mxu0 0
    %1252 = vmatpush1.bf16.msra.mxu0 0
    %1253 = vmatprep.subr.bf16.mxu0 0
    %1254 = vmatpush1.bf16.msra.mxu0 0
    %1255 = vmatprep.subr.bf16.mxu0 0
    %1256 = vmatpush1.bf16.msra.mxu0 0
    %1257 = vmatprep.subr.bf16.mxu0 0
    %1258 = vmatpush1.bf16.msra.mxu0 0
    %1259 = vmatprep.subr.bf16.mxu0 0
    %1260 = vmatpush1.bf16.msra.mxu0 0
    %1261 = vmatprep.subr.bf16.mxu0 0
    %1262 = vmatpush1.bf16.msra.mxu0 0
    %1263 = vmatprep.subr.bf16.mxu0 0
    %1264 = vmatpush1.bf16.msra.mxu0 0
    %1265 = vmatprep.subr.bf16.mxu0 0
    %1266 = vmatpush1.bf16.msra.mxu0 0
    %1267 = vmatprep.subr.bf16.mxu0 0
    %1268 = vmatpush1.bf16.msra.mxu0 0
    %1269 = vmatprep.mubr.bf16.mxu0 0
    %1270 = vmatmul.mubr.bf16.gmra.mrb[0].mxu0 %v1232
    %v1271 = vpop.f32.mrb[0].mxu0
    %v1272 = vadd.f32 0.0, %v1271
    %v1273 = vpop.f32.mrb[0].mxu0
    %v1274 = vpop.f32.mrb[0].mxu0
    %v1275 = vpop.f32.mrb[0].mxu0
    %1276 = vdwg.mxu0
    %v1278 = vsel %vm1041, %v1133, 0
    %v1281 = vsel %vm1141, %v667, 0
    %1283 = vmatprep.subr.bf16.mxu0 0
    %1284 = vmatpush1.bf16.msra.mxu0 %v1281
    %1285 = vmatprep.subr.bf16.mxu0 0
    %1286 = vmatpush1.bf16.msra.mxu0 0
    %1287 = vmatprep.subr.bf16.mxu0 0
    %1288 = vmatpush1.bf16.msra.mxu0 0
    %1289 = vmatprep.subr.bf16.mxu0 0
    %1290 = vmatpush1.bf16.msra.mxu0 0
    %1291 = vmatprep.subr.bf16.mxu0 0
    %1292 = vmatpush1.bf16.msra.mxu0 0
    %1293 = vmatprep.subr.bf16.mxu0 0
    %1294 = vmatpush1.bf16.msra.mxu0 0
    %1295 = vmatprep.subr.bf16.mxu0 0
    %1296 = vmatpush1.bf16.msra.mxu0 0
    %1297 = vmatprep.subr.bf16.mxu0 0
    %1298 = vmatpush1.bf16.msra.mxu0 0
    %1299 = vmatprep.subr.bf16.mxu0 0
    %1300 = vmatpush1.bf16.msra.mxu0 0
    %1301 = vmatprep.subr.bf16.mxu0 0
    %1302 = vmatpush1.bf16.msra.mxu0 0
    %1303 = vmatprep.subr.bf16.mxu0 0
    %1304 = vmatpush1.bf16.msra.mxu0 0
    %1305 = vmatprep.subr.bf16.mxu0 0
    %1306 = vmatpush1.bf16.msra.mxu0 0
    %1307 = vmatprep.subr.bf16.mxu0 0
    %1308 = vmatpush1.bf16.msra.mxu0 0
    %1309 = vmatprep.subr.bf16.mxu0 0
    %1310 = vmatpush1.bf16.msra.mxu0 0
    %1311 = vmatprep.subr.bf16.mxu0 0
    %1312 = vmatpush1.bf16.msra.mxu0 0
    %1313 = vmatprep.subr.bf16.mxu0 0
    %1314 = vmatpush1.bf16.msra.mxu0 0
    %1315 = vmatprep.mubr.bf16.mxu0 0
    %1316 = vmatmul.mubr.bf16.gmra.mrb[0].mxu0 %v1278
    %v1317 = vpop.f32.mrb[0].mxu0
    %v1318 = vadd.f32 0.0, %v1317
    %v1319 = vpop.f32.mrb[0].mxu0
    %v1320 = vpop.f32.mrb[0].mxu0
    %v1321 = vpop.f32.mrb[0].mxu0
    %1322 = vdwg.mxu0
    %v1324 = vsel %vm1041, %v1134, 0
    %v1327 = vsel %vm1141, %v668, 0
    %1329 = vmatprep.subr.bf16.mxu0 0
    %1330 = vmatpush1.bf16.msra.mxu0 %v1327
    %1331 = vmatprep.subr.bf16.mxu0 0
    %1332 = vmatpush1.bf16.msra.mxu0 0
    %1333 = vmatprep.subr.bf16.mxu0 0
    %1334 = vmatpush1.bf16.msra.mxu0 0
    %1335 = vmatprep.subr.bf16.mxu0 0
    %1336 = vmatpush1.bf16.msra.mxu0 0
    %1337 = vmatprep.subr.bf16.mxu0 0
    %1338 = vmatpush1.bf16.msra.mxu0 0
    %1339 = vmatprep.subr.bf16.mxu0 0
    %1340 = vmatpush1.bf16.msra.mxu0 0
    %1341 = vmatprep.subr.bf16.mxu0 0
    %1342 = vmatpush1.bf16.msra.mxu0 0
    %1343 = vmatprep.subr.bf16.mxu0 0
    %1344 = vmatpush1.bf16.msra.mxu0 0
    %1345 = vmatprep.subr.bf16.mxu0 0
    %1346 = vmatpush1.bf16.msra.mxu0 0
    %1347 = vmatprep.subr.bf16.mxu0 0
    %1348 = vmatpush1.bf16.msra.mxu0 0
    %1349 = vmatprep.subr.bf16.mxu0 0
    %1350 = vmatpush1.bf16.msra.mxu0 0
    %1351 = vmatprep.subr.bf16.mxu0 0
    %1352 = vmatpush1.bf16.msra.mxu0 0
    %1353 = vmatprep.subr.bf16.mxu0 0
    %1354 = vmatpush1.bf16.msra.mxu0 0
    %1355 = vmatprep.subr.bf16.mxu0 0
    %1356 = vmatpush1.bf16.msra.mxu0 0
    %1357 = vmatprep.subr.bf16.mxu0 0
    %1358 = vmatpush1.bf16.msra.mxu0 0
    %1359 = vmatprep.subr.bf16.mxu0 0
    %1360 = vmatpush1.bf16.msra.mxu0 0
    %1361 = vmatprep.mubr.bf16.mxu0 0
    %1362 = vmatmul.mubr.bf16.gmra.mrb[0].mxu0 %v1324
    %v1363 = vpop.f32.mrb[0].mxu0
    %v1364 = vadd.f32 0.0, %v1363
    %v1365 = vpop.f32.mrb[0].mxu0
    %v1366 = vpop.f32.mrb[0].mxu0
    %v1367 = vpop.f32.mrb[0].mxu0
    %1368 = vdwg.mxu0
    %v1370 = vsel %vm1041, %v1135, 0
    %v1373 = vsel %vm1141, %v669, 0
    %1375 = vmatprep.subr.bf16.mxu0 0
    %1376 = vmatpush1.bf16.msra.mxu0 %v1373
    %1377 = vmatprep.subr.bf16.mxu0 0
    %1378 = vmatpush1.bf16.msra.mxu0 0
    %1379 = vmatprep.subr.bf16.mxu0 0
    %1380 = vmatpush1.bf16.msra.mxu0 0
    %1381 = vmatprep.subr.bf16.mxu0 0
    %1382 = vmatpush1.bf16.msra.mxu0 0
    %1383 = vmatprep.subr.bf16.mxu0 0
    %1384 = vmatpush1.bf16.msra.mxu0 0
    %1385 = vmatprep.subr.bf16.mxu0 0
    %1386 = vmatpush1.bf16.msra.mxu0 0
    %1387 = vmatprep.subr.bf16.mxu0 0
    %1388 = vmatpush1.bf16.msra.mxu0 0
    %1389 = vmatprep.subr.bf16.mxu0 0
    %1390 = vmatpush1.bf16.msra.mxu0 0
    %1391 = vmatprep.subr.bf16.mxu0 0
    %1392 = vmatpush1.bf16.msra.mxu0 0
    %1393 = vmatprep.subr.bf16.mxu0 0
    %1394 = vmatpush1.bf16.msra.mxu0 0
    %1395 = vmatprep.subr.bf16.mxu0 0
    %1396 = vmatpush1.bf16.msra.mxu0 0
    %1397 = vmatprep.subr.bf16.mxu0 0
    %1398 = vmatpush1.bf16.msra.mxu0 0
    %1399 = vmatprep.subr.bf16.mxu0 0
    %1400 = vmatpush1.bf16.msra.mxu0 0
    %1401 = vmatprep.subr.bf16.mxu0 0
    %1402 = vmatpush1.bf16.msra.mxu0 0
    %1403 = vmatprep.subr.bf16.mxu0 0
    %1404 = vmatpush1.bf16.msra.mxu0 0
    %1405 = vmatprep.subr.bf16.mxu0 0
    %1406 = vmatpush1.bf16.msra.mxu0 0
    %1407 = vmatprep.mubr.bf16.mxu0 0
    %1408 = vmatmul.mubr.bf16.gmra.mrb[0].mxu0 %v1370
    %v1409 = vpop.f32.mrb[0].mxu0
    %v1410 = vadd.f32 0.0, %v1409
    %v1411 = vpop.f32.mrb[0].mxu0
    %v1412 = vpop.f32.mrb[0].mxu0
    %v1413 = vpop.f32.mrb[0].mxu0
    %1414 = vdwg.mxu0
    %v1416 = vsel %vm1041, %v1136, 0
    %v1419 = vsel %vm1141, %v670, 0
    %1421 = vmatprep.subr.bf16.mxu0 0
    %1422 = vmatpush1.bf16.msra.mxu0 %v1419
    %1423 = vmatprep.subr.bf16.mxu0 0
    %1424 = vmatpush1.bf16.msra.mxu0 0
    %1425 = vmatprep.subr.bf16.mxu0 0
    %1426 = vmatpush1.bf16.msra.mxu0 0
    %1427 = vmatprep.subr.bf16.mxu0 0
    %1428 = vmatpush1.bf16.msra.mxu0 0
    %1429 = vmatprep.subr.bf16.mxu0 0
    %1430 = vmatpush1.bf16.msra.mxu0 0
    %1431 = vmatprep.subr.bf16.mxu0 0
    %1432 = vmatpush1.bf16.msra.mxu0 0
    %1433 = vmatprep.subr.bf16.mxu0 0
    %1434 = vmatpush1.bf16.msra.mxu0 0
    %1435 = vmatprep.subr.bf16.mxu0 0
    %1436 = vmatpush1.bf16.msra.mxu0 0
    %1437 = vmatprep.subr.bf16.mxu0 0
    %1438 = vmatpush1.bf16.msra.mxu0 0
    %1439 = vmatprep.subr.bf16.mxu0 0
    %1440 = vmatpush1.bf16.msra.mxu0 0
    %1441 = vmatprep.subr.bf16.mxu0 0
    %1442 = vmatpush1.bf16.msra.mxu0 0
    %1443 = vmatprep.subr.bf16.mxu0 0
    %1444 = vmatpush1.bf16.msra.mxu0 0
    %1445 = vmatprep.subr.bf16.mxu0 0
    %1446 = vmatpush1.bf16.msra.mxu0 0
    %1447 = vmatprep.subr.bf16.mxu0 0
    %1448 = vmatpush1.bf16.msra.mxu0 0
    %1449 = vmatprep.subr.bf16.mxu0 0
    %1450 = vmatpush1.bf16.msra.mxu0 0
    %1451 = vmatprep.subr.bf16.mxu0 0
    %1452 = vmatpush1.bf16.msra.mxu0 0
    %1453 = vmatprep.mubr.bf16.mxu0 0
    %1454 = vmatmul.mubr.bf16.gmra.mrb[0].mxu0 %v1416
    %v1455 = vpop.f32.mrb[0].mxu0
    %v1456 = vadd.f32 0.0, %v1455
    %v1457 = vpop.f32.mrb[0].mxu0
    %v1458 = vpop.f32.mrb[0].mxu0
    %v1459 = vpop.f32.mrb[0].mxu0
    %1460 = vdwg.mxu0
    %v1462 = vsel %vm1041, %v1137, 0
    %v1465 = vsel %vm1141, %v671, 0
    %1467 = vmatprep.subr.bf16.mxu0 0
    %1468 = vmatpush1.bf16.msra.mxu0 %v1465
    %1469 = vmatprep.subr.bf16.mxu0 0
    %1470 = vmatpush1.bf16.msra.mxu0 0
    %1471 = vmatprep.subr.bf16.mxu0 0
    %1472 = vmatpush1.bf16.msra.mxu0 0
    %1473 = vmatprep.subr.bf16.mxu0 0
    %1474 = vmatpush1.bf16.msra.mxu0 0
    %1475 = vmatprep.subr.bf16.mxu0 0
    %1476 = vmatpush1.bf16.msra.mxu0 0
    %1477 = vmatprep.subr.bf16.mxu0 0
    %1478 = vmatpush1.bf16.msra.mxu0 0
    %1479 = vmatprep.subr.bf16.mxu0 0
    %1480 = vmatpush1.bf16.msra.mxu0 0
    %1481 = vmatprep.subr.bf16.mxu0 0
    %1482 = vmatpush1.bf16.msra.mxu0 0
    %1483 = vmatprep.subr.bf16.mxu0 0
    %1484 = vmatpush1.bf16.msra.mxu0 0
    %1485 = vmatprep.subr.bf16.mxu0 0
    %1486 = vmatpush1.bf16.msra.mxu0 0
    %1487 = vmatprep.subr.bf16.mxu0 0
    %1488 = vmatpush1.bf16.msra.mxu0 0
    %1489 = vmatprep.subr.bf16.mxu0 0
    %1490 = vmatpush1.bf16.msra.mxu0 0
    %1491 = vmatprep.subr.bf16.mxu0 0
    %1492 = vmatpush1.bf16.msra.mxu0 0
    %1493 = vmatprep.subr.bf16.mxu0 0
    %1494 = vmatpush1.bf16.msra.mxu0 0
    %1495 = vmatprep.subr.bf16.mxu0 0
    %1496 = vmatpush1.bf16.msra.mxu0 0
    %1497 = vmatprep.subr.bf16.mxu0 0
    %1498 = vmatpush1.bf16.msra.mxu0 0
    %1499 = vmatprep.mubr.bf16.mxu0 0
    %1500 = vmatmul.mubr.bf16.gmra.mrb[0].mxu0 %v1462
    %v1501 = vpop.f32.mrb[0].mxu0
    %v1502 = vadd.f32 0.0, %v1501
    %v1503 = vpop.f32.mrb[0].mxu0
    %v1504 = vpop.f32.mrb[0].mxu0
    %v1505 = vpop.f32.mrb[0].mxu0
    %1506 = vdwg.mxu0
    %1508 = vrot.lane.b32.xlu0 %v1226, 32
    %v1509 = vpop.permute.xlu0 %1508
    %1512 = vrot.lane.b32.xlu0 %v1272, 64
    %v1513 = vpop.permute.xlu0 %1512
    %1516 = vrot.lane.b32.xlu0 %v1318, 96
    %v1517 = vpop.permute.xlu0 %1516
    %v1519 = vsel %vm672, %v1180, %v1509
    %vm1520 = vcmask 523264
    %v1521 = vsel %vm1520, %v1519, %v1513
    %vm1522 = vcmask 785408
    %v1523 = vsel %vm1522, %v1521, %v1517
    %1525 = vrot.lane.b32.xlu0 %v1410, 32
    %v1526 = vpop.permute.xlu0 %1525
    %1529 = vrot.lane.b32.xlu0 %v1456, 64
    %v1530 = vpop.permute.xlu0 %1529
    %1533 = vrot.lane.b32.xlu0 %v1502, 96
    %v1534 = vpop.permute.xlu0 %1533
    %v1536 = vsel %vm672, %v1364, %v1526
    %v1537 = vsel %vm1520, %v1536, %v1530
    %v1538 = vsel %vm1522, %v1537, %v1534
    %v1539 = vpack.c.bf16 %v1538, %v1523
    %v1540 = vld [vmem:[#allocation10] sm:$0xf]
    %v1541 = vld [vmem:[#allocation10 + $0x4] sm:$0xf]
    %v1542 = vld [vmem:[#allocation10 + $0x8] sm:$0xf]
    %v1543 = vld [vmem:[#allocation10 + $0xc] sm:$0xf]
    %v1544 = vld [vmem:[#allocation10 + $0x10] sm:$0xf]
    %v1545 = vld [vmem:[#allocation10 + $0x14] sm:$0xf]
    %v1546 = vld [vmem:[#allocation10 + $0x18] sm:$0xf]
    %v1547 = vld [vmem:[#allocation10 + $0x1c] sm:$0xf]
    %v1548 = vld [vmem:[#allocation10 + $0x20] sm:$0xf]
    %v1549 = vld [vmem:[#allocation10 + $0x24] sm:$0xf]
    %v1550 = vld [vmem:[#allocation10 + $0x28] sm:$0xf]
    %v1551 = vld [vmem:[#allocation10 + $0x2c] sm:$0xf]
    %v1552 = vld [vmem:[#allocation10 + $0x30] sm:$0xf]
    %v1553 = vld [vmem:[#allocation10 + $0x34] sm:$0xf]
    %v1554 = vld [vmem:[#allocation10 + $0x38] sm:$0xf]
    %v1555 = vld [vmem:[#allocation10 + $0x3c] sm:$0xf]
    %v1556 = vld [vmem:[%s6] sm:$0x1]
    %v1558 = vlaneseq
    %v1559 = vshrl.u32 %v1558, 7
    %v1560 = vsub.s32 0, %v1559
    %v1561 = vrot.slane %v1556, %v1560
    %v1579 = vunpack.c.l.b16 %v1540
    %v1580 = vunpack.c.l.b16 %v1541
    %v1581 = vunpack.c.l.b16 %v1542
    %v1582 = vunpack.c.l.b16 %v1543
    %v1583 = vunpack.c.l.b16 %v1544
    %v1584 = vunpack.c.l.b16 %v1545
    %v1585 = vunpack.c.l.b16 %v1546
    %v1586 = vunpack.c.l.b16 %v1547
    %v1587 = vunpack.c.l.b16 %v1548
    %v1588 = vunpack.c.l.b16 %v1549
    %v1589 = vunpack.c.l.b16 %v1550
    %v1590 = vunpack.c.l.b16 %v1551
    %v1591 = vunpack.c.l.b16 %v1552
    %v1592 = vunpack.c.l.b16 %v1553
    %v1593 = vunpack.c.l.b16 %v1554
    %v1594 = vunpack.c.l.b16 %v1555
    %v1595 = vpack.c.b16 %v1580, %v1579
    %v1596 = vpack.c.b16 %v1582, %v1581
    %v1597 = vpack.c.b16 %v1584, %v1583
    %v1598 = vpack.c.b16 %v1586, %v1585
    %v1599 = vpack.c.b16 %v1588, %v1587
    %v1600 = vpack.c.b16 %v1590, %v1589
    %v1601 = vpack.c.b16 %v1592, %v1591
    %v1602 = vpack.c.b16 %v1594, %v1593
    %1611 = vmatprep.subr.bf16.mxu0 0
    %1612 = vmatpush1.bf16.msra.mxu0 %v1595
    %1613 = vmatprep.subr.bf16.mxu0 0
    %1614 = vmatpush1.bf16.msra.mxu0 %v1596
    %1615 = vmatprep.subr.bf16.mxu0 0
    %1616 = vmatpush1.bf16.msra.mxu0 %v1597
    %1617 = vmatprep.subr.bf16.mxu0 0
    %1618 = vmatpush1.bf16.msra.mxu0 %v1598
    %1619 = vmatprep.subr.bf16.mxu0 0
    %1620 = vmatpush1.bf16.msra.mxu0 %v1599
    %1621 = vmatprep.subr.bf16.mxu0 0
    %1622 = vmatpush1.bf16.msra.mxu0 %v1600
    %1623 = vmatprep.subr.bf16.mxu0 0
    %1624 = vmatpush1.bf16.msra.mxu0 %v1601
    %1625 = vmatprep.subr.bf16.mxu0 0
    %1626 = vmatpush1.bf16.msra.mxu0 %v1602
    %1627 = vmatprep.subr.bf16.mxu0 0
    %1628 = vmatpush1.bf16.msra.mxu0 0
    %1629 = vmatprep.subr.bf16.mxu0 0
    %1630 = vmatpush1.bf16.msra.mxu0 0
    %1631 = vmatprep.subr.bf16.mxu0 0
    %1632 = vmatpush1.bf16.msra.mxu0 0
    %1633 = vmatprep.subr.bf16.mxu0 0
    %1634 = vmatpush1.bf16.msra.mxu0 0
    %1635 = vmatprep.subr.bf16.mxu0 0
    %1636 = vmatpush1.bf16.msra.mxu0 0
    %1637 = vmatprep.subr.bf16.mxu0 0
    %1638 = vmatpush1.bf16.msra.mxu0 0
    %1639 = vmatprep.subr.bf16.mxu0 0
    %1640 = vmatpush1.bf16.msra.mxu0 0
    %1641 = vmatprep.subr.bf16.mxu0 0
    %1642 = vmatpush1.bf16.msra.mxu0 0
    %1643 = vmatprep.mubr.bf16.mxu0 0
    %1644 = vmatmul.mubr.bf16.gmra.mrb[0].mxu0 %v1539
    %v1645 = vpop.f32.mrb[0].mxu0
    %v1646 = vadd.f32 %v1561, %v1645
    %v1647 = vpop.f32.mrb[0].mxu0
    %v1648 = vpop.f32.mrb[0].mxu0
    %v1649 = vadd.f32 %v1561, %v1648
    %v1650 = vpop.f32.mrb[0].mxu0
    %1651 = vdwg.mxu0
    %v1652 = vadd.f32 %v274, %v1646
    %v1653 = vadd.f32 %v277, %v1649
    %v1654 = vld [vmem:[%s13] sm:$0x1]
    %v1655 = vld [vmem:[%s14] sm:$0x1]
    %1656 = vadd.xlane.f32.xlu0 %v1652
    %v1657 = vpop.xlane.xlu0 %1656
    %1658 = vadd.xlane.f32.xlu0 %v1653
    %v1659 = vpop.xlane.xlu0 %1658
    %v1660 = vmul.f32 %v1652, %v1652
    %v1661 = vmul.f32 %v1653, %v1653
    %1662 = vadd.xlane.f32.xlu0 %v1660
    %v1663 = vpop.xlane.xlu0 %1662
    %1664 = vadd.xlane.f32.xlu0 %v1661
    %v1665 = vpop.xlane.xlu0 %1664
    %v1666 = vmul.f32 %v1657, 0.0078125
    %v1667 = vmul.f32 %v1659, 0.0078125
    %v1668 = vmul.f32 %v1663, 0.0078125
    %v1669 = vmul.f32 %v1665, 0.0078125
    %v1670 = vmul.f32 %v1666, %v1666
    %v1671 = vmul.f32 %v1667, %v1667
    %v1672 = vsub.f32 %v1668, %v1670
    %v1673 = vsub.f32 %v1669, %v1671
    %v1674 = vmax.f32 %v1672, 0.0
    %v1675 = vmax.f32 %v1673, 0.0
    %v1676 = vsub.f32 %v1652, %v1666
    %v1677 = vsub.f32 %v1653, %v1667
    %v1678 = vadd.f32 %v1674, 1e-05
    %v1679 = vadd.f32 %v1675, 1e-05
    %v1680 = vrsqrt.pop %v1678
    %v1681 = vrsqrt.pop %v1679
    %v1682 = vmul.f32 %v1676, %v1680
    %v1683 = vmul.f32 %v1677, %v1681
    %v1685 = vlaneseq
    %v1686 = vshrl.u32 %v1685, 7
    %v1687 = vsub.s32 0, %v1686
    %v1688 = vrot.slane %v1654, %v1687
    %v1690 = vmul.f32 %v1682, %v1688
    %v1691 = vmul.f32 %v1683, %v1688
    %v1693 = vlaneseq
    %v1694 = vshrl.u32 %v1693, 7
    %v1695 = vsub.s32 0, %v1694
    %v1696 = vrot.slane %v1655, %v1695
    %v1698 = vadd.f32 %v1690, %v1696
    %v1699 = vadd.f32 %v1691, %v1696
    %v1700 = vpack.c.bf16 %v1699, %v1698
    %v1701 = vld [vmem:[#allocation11] sm:$0xff]
    %v1702 = vld [vmem:[#allocation11 + $0x8] sm:$0xff]
    %v1703 = vld [vmem:[#allocation11 + $0x10] sm:$0xff]
    %v1704 = vld [vmem:[#allocation11 + $0x18] sm:$0xff]
    %v1705 = vld [vmem:[#allocation11 + $0x20] sm:$0xff]
    %v1706 = vld [vmem:[#allocation11 + $0x28] sm:$0xff]
    %v1707 = vld [vmem:[#allocation11 + $0x30] sm:$0xff]
    %v1708 = vld [vmem:[#allocation11 + $0x38] sm:$0xff]
    %v1709 = vld [vmem:[#allocation11 + $0x40] sm:$0xff]
    %v1710 = vld [vmem:[#allocation11 + $0x48] sm:$0xff]
    %v1711 = vld [vmem:[#allocation11 + $0x50] sm:$0xff]
    %v1712 = vld [vmem:[#allocation11 + $0x58] sm:$0xff]
    %v1713 = vld [vmem:[#allocation11 + $0x60] sm:$0xff]
    %v1714 = vld [vmem:[#allocation11 + $0x68] sm:$0xff]
    %v1715 = vld [vmem:[#allocation11 + $0x70] sm:$0xff]
    %v1716 = vld [vmem:[#allocation11 + $0x78] sm:$0xff]
    %v1717 = vld [vmem:[#allocation11 + $0x80] sm:$0xff]
    %v1718 = vld [vmem:[#allocation11 + $0x88] sm:$0xff]
    %v1719 = vld [vmem:[#allocation11 + $0x90] sm:$0xff]
    %v1720 = vld [vmem:[#allocation11 + $0x98] sm:$0xff]
    %v1721 = vld [vmem:[#allocation11 + $0xa0] sm:$0xff]
    %v1722 = vld [vmem:[#allocation11 + $0xa8] sm:$0xff]
    %v1723 = vld [vmem:[#allocation11 + $0xb0] sm:$0xff]
    %v1724 = vld [vmem:[#allocation11 + $0xb8] sm:$0xff]
    %v1725 = vld [vmem:[#allocation11 + $0xc0] sm:$0xff]
    %v1726 = vld [vmem:[#allocation11 + $0xc8] sm:$0xff]
    %v1727 = vld [vmem:[#allocation11 + $0xd0] sm:$0xff]
    %v1728 = vld [vmem:[#allocation11 + $0xd8] sm:$0xff]
    %v1729 = vld [vmem:[#allocation11 + $0xe0] sm:$0xff]
    %v1730 = vld [vmem:[#allocation11 + $0xe8] sm:$0xff]
    %v1731 = vld [vmem:[#allocation11 + $0xf0] sm:$0xff]
    %v1732 = vld [vmem:[#allocation11 + $0xf8] sm:$0xff]
    %v1733 = vld [vmem:[%s10] sm:$0xf]
    %v1735 = vlaneseq
    %v1736 = vshrl.u32 %v1735, 7
    %v1737 = vsub.s32 0, %v1736
    %v1738 = vrot.slane %v1733, %v1737
    %v1739 = vlaneseq
    %v1740 = vshrl.u32 %v1739, 7
    %v1741 = vsub.s32 1, %v1740
    %v1742 = vrot.slane %v1733, %v1741
    %v1743 = vlaneseq
    %v1744 = vshrl.u32 %v1743, 7
    %v1745 = vsub.s32 2, %v1744
    %v1746 = vrot.slane %v1733, %v1745
    %v1747 = vlaneseq
    %v1748 = vshrl.u32 %v1747, 7
    %v1749 = vsub.s32 3, %v1748
    %v1750 = vrot.slane %v1733, %v1749
    %v1787 = vunpack.c.l.b16 %v1701
    %v1788 = vunpack.c.h.b16 %v1701
    %v1789 = vunpack.c.l.b16 %v1702
    %v1790 = vunpack.c.h.b16 %v1702
    %v1791 = vunpack.c.l.b16 %v1703
    %v1792 = vunpack.c.h.b16 %v1703
    %v1793 = vunpack.c.l.b16 %v1704
    %v1794 = vunpack.c.h.b16 %v1704
    %v1795 = vunpack.c.l.b16 %v1705
    %v1796 = vunpack.c.h.b16 %v1705
    %v1797 = vunpack.c.l.b16 %v1706
    %v1798 = vunpack.c.h.b16 %v1706
    %v1799 = vunpack.c.l.b16 %v1707
    %v1800 = vunpack.c.h.b16 %v1707
    %v1801 = vunpack.c.l.b16 %v1708
    %v1802 = vunpack.c.h.b16 %v1708
    %v1803 = vunpack.c.l.b16 %v1709
    %v1804 = vunpack.c.h.b16 %v1709
    %v1805 = vunpack.c.l.b16 %v1710
    %v1806 = vunpack.c.h.b16 %v1710
    %v1807 = vunpack.c.l.b16 %v1711
    %v1808 = vunpack.c.h.b16 %v1711
    %v1809 = vunpack.c.l.b16 %v1712
    %v1810 = vunpack.c.h.b16 %v1712
    %v1811 = vunpack.c.l.b16 %v1713
    %v1812 = vunpack.c.h.b16 %v1713
    %v1813 = vunpack.c.l.b16 %v1714
    %v1814 = vunpack.c.h.b16 %v1714
    %v1815 = vunpack.c.l.b16 %v1715
    %v1816 = vunpack.c.h.b16 %v1715
    %v1817 = vunpack.c.l.b16 %v1716
    %v1818 = vunpack.c.h.b16 %v1716
    %v1819 = vunpack.c.l.b16 %v1717
    %v1820 = vunpack.c.h.b16 %v1717
    %v1821 = vunpack.c.l.b16 %v1718
    %v1822 = vunpack.c.h.b16 %v1718
    %v1823 = vunpack.c.l.b16 %v1719
    %v1824 = vunpack.c.h.b16 %v1719
    %v1825 = vunpack.c.l.b16 %v1720
    %v1826 = vunpack.c.h.b16 %v1720
    %v1827 = vunpack.c.l.b16 %v1721
    %v1828 = vunpack.c.h.b16 %v1721
    %v1829 = vunpack.c.l.b16 %v1722
    %v1830 = vunpack.c.h.b16 %v1722
    %v1831 = vunpack.c.l.b16 %v1723
    %v1832 = vunpack.c.h.b16 %v1723
    %v1833 = vunpack.c.l.b16 %v1724
    %v1834 = vunpack.c.h.b16 %v1724
    %v1835 = vunpack.c.l.b16 %v1725
    %v1836 = vunpack.c.h.b16 %v1725
    %v1837 = vunpack.c.l.b16 %v1726
    %v1838 = vunpack.c.h.b16 %v1726
    %v1839 = vunpack.c.l.b16 %v1727
    %v1840 = vunpack.c.h.b16 %v1727
    %v1841 = vunpack.c.l.b16 %v1728
    %v1842 = vunpack.c.h.b16 %v1728
    %v1843 = vunpack.c.l.b16 %v1729
    %v1844 = vunpack.c.h.b16 %v1729
    %v1845 = vunpack.c.l.b16 %v1730
    %v1846 = vunpack.c.h.b16 %v1730
    %v1847 = vunpack.c.l.b16 %v1731
    %v1848 = vunpack.c.h.b16 %v1731
    %v1849 = vunpack.c.l.b16 %v1732
    %v1850 = vunpack.c.h.b16 %v1732
    %v1851 = vpack.c.b16 %v1791, %v1787
    %v1852 = vpack.c.b16 %v1792, %v1788
    %v1853 = vpack.c.b16 %v1793, %v1789
    %v1854 = vpack.c.b16 %v1794, %v1790
    %v1855 = vpack.c.b16 %v1799, %v1795
    %v1856 = vpack.c.b16 %v1800, %v1796
    %v1857 = vpack.c.b16 %v1801, %v1797
    %v1858 = vpack.c.b16 %v1802, %v1798
    %v1859 = vpack.c.b16 %v1807, %v1803
    %v1860 = vpack.c.b16 %v1808, %v1804
    %v1861 = vpack.c.b16 %v1809, %v1805
    %v1862 = vpack.c.b16 %v1810, %v1806
    %v1863 = vpack.c.b16 %v1815, %v1811
    %v1864 = vpack.c.b16 %v1816, %v1812
    %v1865 = vpack.c.b16 %v1817, %v1813
    %v1866 = vpack.c.b16 %v1818, %v1814
    %v1867 = vpack.c.b16 %v1823, %v1819
    %v1868 = vpack.c.b16 %v1824, %v1820
    %v1869 = vpack.c.b16 %v1825, %v1821
    %v1870 = vpack.c.b16 %v1826, %v1822
    %v1871 = vpack.c.b16 %v1831, %v1827
    %v1872 = vpack.c.b16 %v1832, %v1828
    %v1873 = vpack.c.b16 %v1833, %v1829
    %v1874 = vpack.c.b16 %v1834, %v1830
    %v1875 = vpack.c.b16 %v1839, %v1835
    %v1876 = vpack.c.b16 %v1840, %v1836
    %v1877 = vpack.c.b16 %v1841, %v1837
    %v1878 = vpack.c.b16 %v1842, %v1838
    %v1879 = vpack.c.b16 %v1847, %v1843
    %v1880 = vpack.c.b16 %v1848, %v1844
    %v1881 = vpack.c.b16 %v1849, %v1845
    %v1882 = vpack.c.b16 %v1850, %v1846
    %1915 = vmatprep.subr.bf16.mxu0 %v1852
    %1916 = vmatpush1.bf16.msra.mxu0 %v1851
    %1917 = vmatprep.subr.bf16.mxu0 %v1856
    %1918 = vmatpush1.bf16.msra.mxu0 %v1855
    %1919 = vmatprep.subr.bf16.mxu0 %v1860
    %1920 = vmatpush1.bf16.msra.mxu0 %v1859
    %1921 = vmatprep.subr.bf16.mxu0 %v1864
    %1922 = vmatpush1.bf16.msra.mxu0 %v1863
    %1923 = vmatprep.subr.bf16.mxu0 %v1868
    %1924 = vmatpush1.bf16.msra.mxu0 %v1867
    %1925 = vmatprep.subr.bf16.mxu0 %v1872
    %1926 = vmatpush1.bf16.msra.mxu0 %v1871
    %1927 = vmatprep.subr.bf16.mxu0 %v1876
    %1928 = vmatpush1.bf16.msra.mxu0 %v1875
    %1929 = vmatprep.subr.bf16.mxu0 %v1880
    %1930 = vmatpush1.bf16.msra.mxu0 %v1879
    %1931 = vmatprep.subr.bf16.mxu0 0
    %1932 = vmatpush1.bf16.msra.mxu0 0
    %1933 = vmatprep.subr.bf16.mxu0 0
    %1934 = vmatpush1.bf16.msra.mxu0 0
    %1935 = vmatprep.subr.bf16.mxu0 0
    %1936 = vmatpush1.bf16.msra.mxu0 0
    %1937 = vmatprep.subr.bf16.mxu0 0
    %1938 = vmatpush1.bf16.msra.mxu0 0
    %1939 = vmatprep.subr.bf16.mxu0 0
    %1940 = vmatpush1.bf16.msra.mxu0 0
    %1941 = vmatprep.subr.bf16.mxu0 0
    %1942 = vmatpush1.bf16.msra.mxu0 0
    %1943 = vmatprep.subr.bf16.mxu0 0
    %1944 = vmatpush1.bf16.msra.mxu0 0
    %1945 = vmatprep.subr.bf16.mxu0 0
    %1946 = vmatpush1.bf16.msra.mxu0 0
    %1947 = vmatprep.mubr.bf16.mxu0 0
    %1948 = vmatmul.mubr.bf16.gmra.mrb[0].mxu0 %v1700
    %v1949 = vpop.f32.mrb[0].mxu0
    %v1950 = vadd.f32 %v1738, %v1949
    %v1951 = vpop.f32.mrb[0].mxu0
    %v1952 = vadd.f32 %v1742, %v1951
    %v1953 = vpop.f32.mrb[0].mxu0
    %v1954 = vadd.f32 %v1738, %v1953
    %v1955 = vpop.f32.mrb[0].mxu0
    %v1956 = vadd.f32 %v1742, %v1955
    %1957 = vdwg.mxu0
    %1958 = vmatprep.subr.bf16.mxu0 %v1854
    %1959 = vmatpush1.bf16.msra.mxu0 %v1853
    %1960 = vmatprep.subr.bf16.mxu0 %v1858
    %1961 = vmatpush1.bf16.msra.mxu0 %v1857
    %1962 = vmatprep.subr.bf16.mxu0 %v1862
    %1963 = vmatpush1.bf16.msra.mxu0 %v1861
    %1964 = vmatprep.subr.bf16.mxu0 %v1866
    %1965 = vmatpush1.bf16.msra.mxu0 %v1865
    %1966 = vmatprep.subr.bf16.mxu0 %v1870
    %1967 = vmatpush1.bf16.msra.mxu0 %v1869
    %1968 = vmatprep.subr.bf16.mxu0 %v1874
    %1969 = vmatpush1.bf16.msra.mxu0 %v1873
    %1970 = vmatprep.subr.bf16.mxu0 %v1878
    %1971 = vmatpush1.bf16.msra.mxu0 %v1877
    %1972 = vmatprep.subr.bf16.mxu0 %v1882
    %1973 = vmatpush1.bf16.msra.mxu0 %v1881
    %1974 = vmatprep.subr.bf16.mxu0 0
    %1975 = vmatpush1.bf16.msra.mxu0 0
    %1976 = vmatprep.subr.bf16.mxu0 0
    %1977 = vmatpush1.bf16.msra.mxu0 0
    %1978 = vmatprep.subr.bf16.mxu0 0
    %1979 = vmatpush1.bf16.msra.mxu0 0
    %1980 = vmatprep.subr.bf16.mxu0 0
    %1981 = vmatpush1.bf16.msra.mxu0 0
    %1982 = vmatprep.subr.bf16.mxu0 0
    %1983 = vmatpush1.bf16.msra.mxu0 0
    %1984 = vmatprep.subr.bf16.mxu0 0
    %1985 = vmatpush1.bf16.msra.mxu0 0
    %1986 = vmatprep.subr.bf16.mxu0 0
    %1987 = vmatpush1.bf16.msra.mxu0 0
    %1988 = vmatprep.subr.bf16.mxu0 0
    %1989 = vmatpush1.bf16.msra.mxu0 0
    %1990 = vmatprep.mubr.bf16.mxu0 0
    %1991 = vmatmul.mubr.bf16.gmra.mrb[0].mxu0 %v1700
    %v1992 = vpop.f32.mrb[0].mxu0
    %v1993 = vadd.f32 %v1746, %v1992
    %v1994 = vpop.f32.mrb[0].mxu0
    %v1995 = vadd.f32 %v1750, %v1994
    %v1996 = vpop.f32.mrb[0].mxu0
    %v1997 = vadd.f32 %v1746, %v1996
    %v1998 = vpop.f32.mrb[0].mxu0
    %v1999 = vadd.f32 %v1750, %v1998
    %2000 = vdwg.mxu0
    %v2001 = vmax.f32 %v1950, 0.0
    %v2002 = vmax.f32 %v1952, 0.0
    %v2003 = vmax.f32 %v1993, 0.0
    %v2004 = vmax.f32 %v1995, 0.0
    %v2005 = vmax.f32 %v1954, 0.0
    %v2006 = vmax.f32 %v1956, 0.0
    %v2007 = vmax.f32 %v1997, 0.0
    %v2008 = vmax.f32 %v1999, 0.0
    %v2009 = vpack.c.bf16 %v2005, %v2001
    %v2010 = vpack.c.bf16 %v2006, %v2002
    %v2011 = vpack.c.bf16 %v2007, %v2003
    %v2012 = vpack.c.bf16 %v2008, %v2004
    %v2013 = vld [vmem:[#allocation13] sm:$0xf]
    %v2014 = vld [vmem:[#allocation13 + $0x4] sm:$0xf]
    %v2015 = vld [vmem:[#allocation13 + $0x8] sm:$0xf]
    %v2016 = vld [vmem:[#allocation13 + $0xc] sm:$0xf]
    %v2017 = vld [vmem:[#allocation13 + $0x10] sm:$0xf]
    %v2018 = vld [vmem:[#allocation13 + $0x14] sm:$0xf]
    %v2019 = vld [vmem:[#allocation13 + $0x18] sm:$0xf]
    %v2020 = vld [vmem:[#allocation13 + $0x1c] sm:$0xf]
    %v2021 = vld [vmem:[#allocation13 + $0x20] sm:$0xf]
    %v2022 = vld [vmem:[#allocation13 + $0x24] sm:$0xf]
    %v2023 = vld [vmem:[#allocation13 + $0x28] sm:$0xf]
    %v2024 = vld [vmem:[#allocation13 + $0x2c] sm:$0xf]
    %v2025 = vld [vmem:[#allocation13 + $0x30] sm:$0xf]
    %v2026 = vld [vmem:[#allocation13 + $0x34] sm:$0xf]
    %v2027 = vld [vmem:[#allocation13 + $0x38] sm:$0xf]
    %v2028 = vld [vmem:[#allocation13 + $0x3c] sm:$0xf]
    %v2029 = vld [vmem:[#allocation13 + $0x40] sm:$0xf]
    %v2030 = vld [vmem:[#allocation13 + $0x44] sm:$0xf]
    %v2031 = vld [vmem:[#allocation13 + $0x48] sm:$0xf]
    %v2032 = vld [vmem:[#allocation13 + $0x4c] sm:$0xf]
    %v2033 = vld [vmem:[#allocation13 + $0x50] sm:$0xf]
    %v2034 = vld [vmem:[#allocation13 + $0x54] sm:$0xf]
    %v2035 = vld [vmem:[#allocation13 + $0x58] sm:$0xf]
    %v2036 = vld [vmem:[#allocation13 + $0x5c] sm:$0xf]
    %v2037 = vld [vmem:[#allocation13 + $0x60] sm:$0xf]
    %v2038 = vld [vmem:[#allocation13 + $0x64] sm:$0xf]
    %v2039 = vld [vmem:[#allocation13 + $0x68] sm:$0xf]
    %v2040 = vld [vmem:[#allocation13 + $0x6c] sm:$0xf]
    %v2041 = vld [vmem:[#allocation13 + $0x70] sm:$0xf]
    %v2042 = vld [vmem:[#allocation13 + $0x74] sm:$0xf]
    %v2043 = vld [vmem:[#allocation13 + $0x78] sm:$0xf]
    %v2044 = vld [vmem:[#allocation13 + $0x7c] sm:$0xf]
    %v2045 = vld [vmem:[#allocation13 + $0x80] sm:$0xf]
    %v2046 = vld [vmem:[#allocation13 + $0x84] sm:$0xf]
    %v2047 = vld [vmem:[#allocation13 + $0x88] sm:$0xf]
    %v2048 = vld [vmem:[#allocation13 + $0x8c] sm:$0xf]
    %v2049 = vld [vmem:[#allocation13 + $0x90] sm:$0xf]
    %v2050 = vld [vmem:[#allocation13 + $0x94] sm:$0xf]
    %v2051 = vld [vmem:[#allocation13 + $0x98] sm:$0xf]
    %v2052 = vld [vmem:[#allocation13 + $0x9c] sm:$0xf]
    %v2053 = vld [vmem:[#allocation13 + $0xa0] sm:$0xf]
    %v2054 = vld [vmem:[#allocation13 + $0xa4] sm:$0xf]
    %v2055 = vld [vmem:[#allocation13 + $0xa8] sm:$0xf]
    %v2056 = vld [vmem:[#allocation13 + $0xac] sm:$0xf]
    %v2057 = vld [vmem:[#allocation13 + $0xb0] sm:$0xf]
    %v2058 = vld [vmem:[#allocation13 + $0xb4] sm:$0xf]
    %v2059 = vld [vmem:[#allocation13 + $0xb8] sm:$0xf]
    %v2060 = vld [vmem:[#allocation13 + $0xbc] sm:$0xf]
    %v2061 = vld [vmem:[#allocation13 + $0xc0] sm:$0xf]
    %v2062 = vld [vmem:[#allocation13 + $0xc4] sm:$0xf]
    %v2063 = vld [vmem:[#allocation13 + $0xc8] sm:$0xf]
    %v2064 = vld [vmem:[#allocation13 + $0xcc] sm:$0xf]
    %v2065 = vld [vmem:[#allocation13 + $0xd0] sm:$0xf]
    %v2066 = vld [vmem:[#allocation13 + $0xd4] sm:$0xf]
    %v2067 = vld [vmem:[#allocation13 + $0xd8] sm:$0xf]
    %v2068 = vld [vmem:[#allocation13 + $0xdc] sm:$0xf]
    %v2069 = vld [vmem:[#allocation13 + $0xe0] sm:$0xf]
    %v2070 = vld [vmem:[#allocation13 + $0xe4] sm:$0xf]
    %v2071 = vld [vmem:[#allocation13 + $0xe8] sm:$0xf]
    %v2072 = vld [vmem:[#allocation13 + $0xec] sm:$0xf]
    %v2073 = vld [vmem:[#allocation13 + $0xf0] sm:$0xf]
    %v2074 = vld [vmem:[#allocation13 + $0xf4] sm:$0xf]
    %v2075 = vld [vmem:[#allocation13 + $0xf8] sm:$0xf]
    %v2076 = vld [vmem:[#allocation13 + $0xfc] sm:$0xf]
    %v2077 = vld [vmem:[%s12] sm:$0x1]
    %v2079 = vlaneseq
    %v2080 = vshrl.u32 %v2079, 7
    %v2081 = vsub.s32 0, %v2080
    %v2082 = vrot.slane %v2077, %v2081
    %v2148 = vunpack.c.l.b16 %v2013
    %v2149 = vunpack.c.l.b16 %v2014
    %v2150 = vunpack.c.l.b16 %v2015
    %v2151 = vunpack.c.l.b16 %v2016
    %v2152 = vunpack.c.l.b16 %v2017
    %v2153 = vunpack.c.l.b16 %v2018
    %v2154 = vunpack.c.l.b16 %v2019
    %v2155 = vunpack.c.l.b16 %v2020
    %v2156 = vunpack.c.l.b16 %v2021
    %v2157 = vunpack.c.l.b16 %v2022
    %v2158 = vunpack.c.l.b16 %v2023
    %v2159 = vunpack.c.l.b16 %v2024
    %v2160 = vunpack.c.l.b16 %v2025
    %v2161 = vunpack.c.l.b16 %v2026
    %v2162 = vunpack.c.l.b16 %v2027
    %v2163 = vunpack.c.l.b16 %v2028
    %v2164 = vunpack.c.l.b16 %v2029
    %v2165 = vunpack.c.l.b16 %v2030
    %v2166 = vunpack.c.l.b16 %v2031
    %v2167 = vunpack.c.l.b16 %v2032
    %v2168 = vunpack.c.l.b16 %v2033
    %v2169 = vunpack.c.l.b16 %v2034
    %v2170 = vunpack.c.l.b16 %v2035
    %v2171 = vunpack.c.l.b16 %v2036
    %v2172 = vunpack.c.l.b16 %v2037
    %v2173 = vunpack.c.l.b16 %v2038
    %v2174 = vunpack.c.l.b16 %v2039
    %v2175 = vunpack.c.l.b16 %v2040
    %v2176 = vunpack.c.l.b16 %v2041
    %v2177 = vunpack.c.l.b16 %v2042
    %v2178 = vunpack.c.l.b16 %v2043
    %v2179 = vunpack.c.l.b16 %v2044
    %v2180 = vunpack.c.l.b16 %v2045
    %v2181 = vunpack.c.l.b16 %v2046
    %v2182 = vunpack.c.l.b16 %v2047
    %v2183 = vunpack.c.l.b16 %v2048
    %v2184 = vunpack.c.l.b16 %v2049
    %v2185 = vunpack.c.l.b16 %v2050
    %v2186 = vunpack.c.l.b16 %v2051
    %v2187 = vunpack.c.l.b16 %v2052
    %v2188 = vunpack.c.l.b16 %v2053
    %v2189 = vunpack.c.l.b16 %v2054
    %v2190 = vunpack.c.l.b16 %v2055
    %v2191 = vunpack.c.l.b16 %v2056
    %v2192 = vunpack.c.l.b16 %v2057
    %v2193 = vunpack.c.l.b16 %v2058
    %v2194 = vunpack.c.l.b16 %v2059
    %v2195 = vunpack.c.l.b16 %v2060
    %v2196 = vunpack.c.l.b16 %v2061
    %v2197 = vunpack.c.l.b16 %v2062
    %v2198 = vunpack.c.l.b16 %v2063
    %v2199 = vunpack.c.l.b16 %v2064
    %v2200 = vunpack.c.l.b16 %v2065
    %v2201 = vunpack.c.l.b16 %v2066
    %v2202 = vunpack.c.l.b16 %v2067
    %v2203 = vunpack.c.l.b16 %v2068
    %v2204 = vunpack.c.l.b16 %v2069
    %v2205 = vunpack.c.l.b16 %v2070
    %v2206 = vunpack.c.l.b16 %v2071
    %v2207 = vunpack.c.l.b16 %v2072
    %v2208 = vunpack.c.l.b16 %v2073
    %v2209 = vunpack.c.l.b16 %v2074
    %v2210 = vunpack.c.l.b16 %v2075
    %v2211 = vunpack.c.l.b16 %v2076
    %v2212 = vpack.c.b16 %v2149, %v2148
    %v2213 = vpack.c.b16 %v2151, %v2150
    %v2214 = vpack.c.b16 %v2153, %v2152
    %v2215 = vpack.c.b16 %v2155, %v2154
    %v2216 = vpack.c.b16 %v2157, %v2156
    %v2217 = vpack.c.b16 %v2159, %v2158
    %v2218 = vpack.c.b16 %v2161, %v2160
    %v2219 = vpack.c.b16 %v2163, %v2162
    %v2220 = vpack.c.b16 %v2165, %v2164
    %v2221 = vpack.c.b16 %v2167, %v2166
    %v2222 = vpack.c.b16 %v2169, %v2168
    %v2223 = vpack.c.b16 %v2171, %v2170
    %v2224 = vpack.c.b16 %v2173, %v2172
    %v2225 = vpack.c.b16 %v2175, %v2174
    %v2226 = vpack.c.b16 %v2177, %v2176
    %v2227 = vpack.c.b16 %v2179, %v2178
    %v2228 = vpack.c.b16 %v2181, %v2180
    %v2229 = vpack.c.b16 %v2183, %v2182
    %v2230 = vpack.c.b16 %v2185, %v2184
    %v2231 = vpack.c.b16 %v2187, %v2186
    %v2232 = vpack.c.b16 %v2189, %v2188
    %v2233 = vpack.c.b16 %v2191, %v2190
    %v2234 = vpack.c.b16 %v2193, %v2192
    %v2235 = vpack.c.b16 %v2195, %v2194
    %v2236 = vpack.c.b16 %v2197, %v2196
    %v2237 = vpack.c.b16 %v2199, %v2198
    %v2238 = vpack.c.b16 %v2201, %v2200
    %v2239 = vpack.c.b16 %v2203, %v2202
    %v2240 = vpack.c.b16 %v2205, %v2204
    %v2241 = vpack.c.b16 %v2207, %v2206
    %v2242 = vpack.c.b16 %v2209, %v2208
    %v2243 = vpack.c.b16 %v2211, %v2210
    %2276 = vmatprep.subr.bf16.mxu0 0
    %2277 = vmatpush1.bf16.msra.mxu0 %v2212
    %2278 = vmatprep.subr.bf16.mxu0 0
    %2279 = vmatpush1.bf16.msra.mxu0 %v2213
    %2280 = vmatprep.subr.bf16.mxu0 0
    %2281 = vmatpush1.bf16.msra.mxu0 %v2214
    %2282 = vmatprep.subr.bf16.mxu0 0
    %2283 = vmatpush1.bf16.msra.mxu0 %v2215
    %2284 = vmatprep.subr.bf16.mxu0 0
    %2285 = vmatpush1.bf16.msra.mxu0 %v2216
    %2286 = vmatprep.subr.bf16.mxu0 0
    %2287 = vmatpush1.bf16.msra.mxu0 %v2217
    %2288 = vmatprep.subr.bf16.mxu0 0
    %2289 = vmatpush1.bf16.msra.mxu0 %v2218
    %2290 = vmatprep.subr.bf16.mxu0 0
    %2291 = vmatpush1.bf16.msra.mxu0 %v2219
    %2292 = vmatprep.subr.bf16.mxu0 0
    %2293 = vmatpush1.bf16.msra.mxu0 %v2220
    %2294 = vmatprep.subr.bf16.mxu0 0
    %2295 = vmatpush1.bf16.msra.mxu0 %v2221
    %2296 = vmatprep.subr.bf16.mxu0 0
    %2297 = vmatpush1.bf16.msra.mxu0 %v2222
    %2298 = vmatprep.subr.bf16.mxu0 0
    %2299 = vmatpush1.bf16.msra.mxu0 %v2223
    %2300 = vmatprep.subr.bf16.mxu0 0
    %2301 = vmatpush1.bf16.msra.mxu0 %v2224
    %2302 = vmatprep.subr.bf16.mxu0 0
    %2303 = vmatpush1.bf16.msra.mxu0 %v2225
    %2304 = vmatprep.subr.bf16.mxu0 0
    %2305 = vmatpush1.bf16.msra.mxu0 %v2226
    %2306 = vmatprep.subr.bf16.mxu0 0
    %2307 = vmatpush1.bf16.msra.mxu0 %v2227
    %2308 = vmatprep.mubr.bf16.mxu0 %v2010
    %2309 = vmatmul.mubr.bf16.gmra.mrb[0].mxu0 %v2009
    %v2310 = vpop.f32.mrb[0].mxu0
    %v2311 = vadd.f32 %v2082, %v2310
    %v2312 = vpop.f32.mrb[0].mxu0
    %v2313 = vpop.f32.mrb[0].mxu0
    %v2314 = vadd.f32 %v2082, %v2313
    %v2315 = vpop.f32.mrb[0].mxu0
    %2316 = vdwg.mxu0
    %2317 = vmatprep.subr.bf16.mxu0 0
    %2318 = vmatpush1.bf16.msra.mxu0 %v2228
    %2319 = vmatprep.subr.bf16.mxu0 0
    %2320 = vmatpush1.bf16.msra.mxu0 %v2229
    %2321 = vmatprep.subr.bf16.mxu0 0
    %2322 = vmatpush1.bf16.msra.mxu0 %v2230
    %2323 = vmatprep.subr.bf16.mxu0 0
    %2324 = vmatpush1.bf16.msra.mxu0 %v2231
    %2325 = vmatprep.subr.bf16.mxu0 0
    %2326 = vmatpush1.bf16.msra.mxu0 %v2232
    %2327 = vmatprep.subr.bf16.mxu0 0
    %2328 = vmatpush1.bf16.msra.mxu0 %v2233
    %2329 = vmatprep.subr.bf16.mxu0 0
    %2330 = vmatpush1.bf16.msra.mxu0 %v2234
    %2331 = vmatprep.subr.bf16.mxu0 0
    %2332 = vmatpush1.bf16.msra.mxu0 %v2235
    %2333 = vmatprep.subr.bf16.mxu0 0
    %2334 = vmatpush1.bf16.msra.mxu0 %v2236
    %2335 = vmatprep.subr.bf16.mxu0 0
    %2336 = vmatpush1.bf16.msra.mxu0 %v2237
    %2337 = vmatprep.subr.bf16.mxu0 0
    %2338 = vmatpush1.bf16.msra.mxu0 %v2238
    %2339 = vmatprep.subr.bf16.mxu0 0
    %2340 = vmatpush1.bf16.msra.mxu0 %v2239
    %2341 = vmatprep.subr.bf16.mxu0 0
    %2342 = vmatpush1.bf16.msra.mxu0 %v2240
    %2343 = vmatprep.subr.bf16.mxu0 0
    %2344 = vmatpush1.bf16.msra.mxu0 %v2241
    %2345 = vmatprep.subr.bf16.mxu0 0
    %2346 = vmatpush1.bf16.msra.mxu0 %v2242
    %2347 = vmatprep.subr.bf16.mxu0 0
    %2348 = vmatpush1.bf16.msra.mxu0 %v2243
    %2349 = vmatprep.mubr.bf16.mxu0 %v2012
    %2350 = vmatmul.mubr.bf16.gmra.mrb[0].mxu0 %v2011
    %v2351 = vpop.f32.mrb[0].mxu0
    %v2352 = vadd.f32 %v2311, %v2351
    %v2353 = vpop.f32.mrb[0].mxu0
    %v2354 = vpop.f32.mrb[0].mxu0
    %v2355 = vadd.f32 %v2314, %v2354
    %v2356 = vpop.f32.mrb[0].mxu0
    %2357 = vdwg.mxu0
    %v2358 = vadd.f32 %v1652, %v2352
    %v2359 = vadd.f32 %v1653, %v2355
    %v2360 = vpack.c.bf16 %v2359, %v2358
    %v2361 = vld [vmem:[#allocation14] sm:$0xf]
    %v2362 = vld [vmem:[#allocation14 + $0x4] sm:$0xf]
    %v2363 = vld [vmem:[#allocation14 + $0x8] sm:$0xf]
    %v2364 = vld [vmem:[#allocation14 + $0xc] sm:$0xf]
    %v2365 = vld [vmem:[#allocation14 + $0x10] sm:$0xf]
    %v2366 = vld [vmem:[#allocation14 + $0x14] sm:$0xf]
    %v2367 = vld [vmem:[#allocation14 + $0x18] sm:$0xf]
    %v2368 = vld [vmem:[#allocation14 + $0x1c] sm:$0xf]
    %v2369 = vld [vmem:[#allocation14 + $0x20] sm:$0xf]
    %v2370 = vld [vmem:[#allocation14 + $0x24] sm:$0xf]
    %v2371 = vld [vmem:[#allocation14 + $0x28] sm:$0xf]
    %v2372 = vld [vmem:[#allocation14 + $0x2c] sm:$0xf]
    %v2373 = vld [vmem:[#allocation14 + $0x30] sm:$0xf]
    %v2374 = vld [vmem:[#allocation14 + $0x34] sm:$0xf]
    %v2375 = vld [vmem:[#allocation14 + $0x38] sm:$0xf]
    %v2376 = vld [vmem:[#allocation14 + $0x3c] sm:$0xf]
    %v2377 = vld [vmem:[%s16] sm:$0x1]
    %v2379 = vlaneseq
    %v2380 = vshrl.u32 %v2379, 7
    %v2381 = vsub.s32 0, %v2380
    %v2382 = vrot.slane %v2377, %v2381
    %v2400 = vunpack.c.l.b16 %v2361
    %v2401 = vunpack.c.l.b16 %v2362
    %v2402 = vunpack.c.l.b16 %v2363
    %v2403 = vunpack.c.l.b16 %v2364
    %v2404 = vunpack.c.l.b16 %v2365
    %v2405 = vunpack.c.l.b16 %v2366
    %v2406 = vunpack.c.l.b16 %v2367
    %v2407 = vunpack.c.l.b16 %v2368
    %v2408 = vunpack.c.l.b16 %v2369
    %v2409 = vunpack.c.l.b16 %v2370
    %v2410 = vunpack.c.l.b16 %v2371
    %v2411 = vunpack.c.l.b16 %v2372
    %v2412 = vunpack.c.l.b16 %v2373
    %v2413 = vunpack.c.l.b16 %v2374
    %v2414 = vunpack.c.l.b16 %v2375
    %v2415 = vunpack.c.l.b16 %v2376
    %v2416 = vpack.c.b16 %v2401, %v2400
    %v2417 = vpack.c.b16 %v2403, %v2402
    %v2418 = vpack.c.b16 %v2405, %v2404
    %v2419 = vpack.c.b16 %v2407, %v2406
    %v2420 = vpack.c.b16 %v2409, %v2408
    %v2421 = vpack.c.b16 %v2411, %v2410
    %v2422 = vpack.c.b16 %v2413, %v2412
    %v2423 = vpack.c.b16 %v2415, %v2414
    %2432 = vmatprep.subr.bf16.mxu0 0
    %2433 = vmatpush1.bf16.msra.mxu0 %v2416
    %2434 = vmatprep.subr.bf16.mxu0 0
    %2435 = vmatpush1.bf16.msra.mxu0 %v2417
    %2436 = vmatprep.subr.bf16.mxu0 0
    %2437 = vmatpush1.bf16.msra.mxu0 %v2418
    %2438 = vmatprep.subr.bf16.mxu0 0
    %2439 = vmatpush1.bf16.msra.mxu0 %v2419
    %2440 = vmatprep.subr.bf16.mxu0 0
    %2441 = vmatpush1.bf16.msra.mxu0 %v2420
    %2442 = vmatprep.subr.bf16.mxu0 0
    %2443 = vmatpush1.bf16.msra.mxu0 %v2421
    %2444 = vmatprep.subr.bf16.mxu0 0
    %2445 = vmatpush1.bf16.msra.mxu0 %v2422
    %2446 = vmatprep.subr.bf16.mxu0 0
    %2447 = vmatpush1.bf16.msra.mxu0 %v2423
    %2448 = vmatprep.subr.bf16.mxu0 0
    %2449 = vmatpush1.bf16.msra.mxu0 0
    %2450 = vmatprep.subr.bf16.mxu0 0
    %2451 = vmatpush1.bf16.msra.mxu0 0
    %2452 = vmatprep.subr.bf16.mxu0 0
    %2453 = vmatpush1.bf16.msra.mxu0 0
    %2454 = vmatprep.subr.bf16.mxu0 0
    %2455 = vmatpush1.bf16.msra.mxu0 0
    %2456 = vmatprep.subr.bf16.mxu0 0
    %2457 = vmatpush1.bf16.msra.mxu0 0
    %2458 = vmatprep.subr.bf16.mxu0 0
    %2459 = vmatpush1.bf16.msra.mxu0 0
    %2460 = vmatprep.subr.bf16.mxu0 0
    %2461 = vmatpush1.bf16.msra.mxu0 0
    %2462 = vmatprep.subr.bf16.mxu0 0
    %2463 = vmatpush1.bf16.msra.mxu0 0
    %2464 = vmatprep.mubr.bf16.mxu0 0
    %2465 = vmatmul.mubr.bf16.gmra.mrb[0].mxu0 %v2360
    %v2466 = vpop.f32.mrb[0].mxu0
    %v2467 = vadd.f32 %v2382, %v2466
    %v2468 = vpop.f32.mrb[0].mxu0
    %v2469 = vpop.f32.mrb[0].mxu0
    %v2470 = vadd.f32 %v2382, %v2469
    %v2471 = vpop.f32.mrb[0].mxu0
    %2472 = vdwg.mxu0
    %2473 = vst [vmem:[#allocation16] sm:$0xff] %v2467
    %2474 = vst [vmem:[#allocation16 + $0x8] sm:$0xff] %v2470
    // Predicated region
    $region102: #{tpu_custom_call.1} parent=1 // pred_check
      _
    $region103: #{tpu_custom_call.1} parent=1 // pred_check_branch
      %2476 = sbr.rel (0) target = $region105
    $region104: #{tpu_custom_call.1} parent=1 // pred_region
      %s2478 = ssub.s32 256, 256
      %2479 = vsyncadd [#allocation4], %s2478
      %s2480 = sshll.u32 [#allocation16], 4
      %s2481 = int_to_ptr.vmem [resolvable:$true] %s2480
      %2486 = dma.vmem_to_hbm [thread:$0]  %s2481, 256, %s17, [#allocation4], 128, 128, 8
    $region105: #{tpu_custom_call.1} parent=1 // pred_fallthru
      _
    // Predicated region
    $region106: #{tpu_custom_call.1} parent=1 // pred_check
      _
    $region107: #{tpu_custom_call.1} parent=1 // pred_check_branch
      %2488 = sbr.rel (0) target = $region109
    $region108: #{tpu_custom_call.1} parent=1 // pred_region
      %2489 = dma.done [#allocation4], 256
    $region109: #{tpu_custom_call.1} parent=1 // pred_fallthru
      _
    %2490 = vsyncpa [#allocation3], 1
    %2491 = vsyncpa [#allocation6], 1
    %2492 = vsyncpa [#allocation9], 1
    %2493 = vsyncpa [#allocation12], 1
    %2494 = vsyncpa [#allocation15], 1
    %2495 = vsyncpa [#allocation4], 1

</llo_original>
